<compile_context>
chip_gen: v5e
topology: v5e:2x2
jax: 0.10.0
libtpu: 0.0.40
codegen_flags: <defaults>
</compile_context>

<pallas_src>
import functools

import jax
import jax.numpy as jnp
from jax.experimental import pallas as pl
from jax.experimental.pallas import tpu as pltpu


def _round_up(x, m):
    return (x + m - 1) // m * m


def _sh_terms(x, y, z, basis_dim):
    """Spherical-harmonic basis terms (gsplat fast eval), elementwise in x/y/z.

    Returns a list of `basis_dim` arrays shaped like x. basis_dim in {1,4,9,16,25};
    ordering matches the torch _eval_sh_bases_fast reference.
    """
    ones = jnp.ones_like(x)
    rows = [0.2820947917738781 * ones]
    if basis_dim <= 1:
        return rows
    tA = -0.48860251190292
    rows += [tA * y, -tA * z, tA * x]
    if basis_dim <= 4:
        return rows
    z2 = z * z
    tB = -1.092548430592079 * z
    tA = 0.5462742152960395
    sC1 = x * x - y * y
    sS1 = 2.0 * x * y
    rows += [tA * sS1, tB * y,
             0.9461746957575601 * z2 - 0.3153915652525201,
             tB * x, tA * sC1]
    if basis_dim <= 9:
        return rows
    tC = -2.285228997322329 * z2 + 0.4570457994644658
    tB = 1.445305721320277 * z
    tA = -0.5900435899266435
    sC2 = x * sC1 - y * sS1
    sS2 = x * sS1 + y * sC1
    rows += [tA * sS2, tB * sS1, tC * y,
             z * (1.865881662950577 * z2 - 1.119528997770346),
             tC * x, tB * sC1, tA * sC2]
    if basis_dim <= 16:
        return rows
    tD = z * (-4.683325804901025 * z2 + 2.007139630671868)
    tC = 3.31161143515146 * z2 - 0.47308734787878
    tB = -1.770130769779931 * z
    tA = 0.6258357354491763
    sC3 = x * sC2 - y * sS2
    sS3 = x * sS2 + y * sC2
    rows += [tA * sS3, tB * sS2, tC * sS1, tD * y,
             1.984313483298443 * z2 * (1.865881662950577 * z2 - 1.119528997770346)
             - 1.006230589874905 * (0.9461746957575601 * z2 - 0.3153915652525201),
             tD * x, tC * sC1, tB * sC2, tA * sC3]
    return rows


def _appearance_kernel(dirs_ref, feat_ref, eb_ref, w1_ref, w2_ref, b2_ref,
                       w3_ref, b3_ref, out_ref, xin_ref, *,
                       num_bases_to_use, feature_dim):
    # dirs_ref: (3, tm) f32, feat_ref: (F, tm) bf16, eb_ref: (W, 1) f32 per-camera bias.
    # xin_ref:  (F + nb, tm) bf16 scratch holding the fused layer-1 operand [feat | SH].
    # Weights transposed & bf16; biases transposed & f32.
    F = feature_dim
    nb = num_bases_to_use

    # Camera axis (grid axis 1) is innermost & "arbitrary": c == 0 runs first for every
    # point tile, so the camera-independent feature rows are copied into the fused
    # operand exactly once per tile and reused for all remaining cameras.
    @pl.when(pl.program_id(1) == 0)
    def _():
        xin_ref[0:F, :] = feat_ref[...]

    # --- normalize directions (== F.normalize eps=1e-12), rsqrt on the EUP slot ---
    dx = dirs_ref[0:1, :]
    dy = dirs_ref[1:2, :]
    dz = dirs_ref[2:3, :]
    inv = jax.lax.rsqrt(jnp.maximum(dx * dx + dy * dy + dz * dz, 1e-24))
    x = dx * inv
    y = dy * inv
    z = dz * inv

    # --- SH basis (f32 math), stored as one aligned bf16 block into the fused operand ---
    sh = jnp.concatenate(_sh_terms(x, y, z, nb), axis=0)        # (nb, tm) f32
    xin_ref[pl.ds(F, nb), :] = sh.astype(jnp.bfloat16)

    # --- MLP (transposed): h^T = W^T @ x^T; bf16 operands, f32 accumulation ---
    h1 = (jnp.dot(w1_ref[...], xin_ref[...],
                  preferred_element_type=jnp.float32)
          + eb_ref[...])                                        # (W, tm) + (W, 1)
    h1 = jnp.maximum(h1, 0.0)

    h2 = jnp.dot(w2_ref[...], h1.astype(jnp.bfloat16),
                 preferred_element_type=jnp.float32) + b2_ref[...]
    h2 = jnp.maximum(h2, 0.0)

    out = jnp.dot(w3_ref[...], h2.astype(jnp.bfloat16),
                  preferred_element_type=jnp.float32) + b3_ref[...]   # (3, tm)
    out_ref[...] = out.astype(out_ref.dtype)


class AppearanceOptParams:
    """Deterministic parameter container mirroring the torch module's __init__."""

    def __init__(self, n, feature_dim, embed_dim=16, sh_degree=3, mlp_width=64,
                 mlp_depth=2, key=jax.random.PRNGKey(0)):
        # TODO(synk): only the default mlp_depth=2 structure (two hidden matmuls) is built.
        self.embed_dim = embed_dim
        self.sh_degree = sh_degree
        self.feature_dim = feature_dim
        self.mlp_width = mlp_width
        self.mlp_depth = mlp_depth
        num_bases = (sh_degree + 1) ** 2
        d_in = embed_dim + feature_dim + num_bases

        keys = jax.random.split(key, 8)
        # Embedding(n, embed_dim): N(0, 1)
        self.embed_table = jax.random.normal(keys[0], (n, embed_dim), jnp.float32)

        def linear(kw, kb, fan_in, fan_out):
            bound = 1.0 / jnp.sqrt(jnp.float32(fan_in))
            w = jax.random.uniform(kw, (fan_in, fan_out), jnp.float32, -bound, bound)
            b = jax.random.uniform(kb, (1, fan_out), jnp.float32, -bound, bound)
            return w, b

        # mlp_depth=2 -> Linear(d_in, W), ReLU, Linear(W, W), ReLU, Linear(W, 3)
        self.w1, self.b1 = linear(keys[1], keys[2], d_in, mlp_width)
        self.w2, self.b2 = linear(keys[3], keys[4], mlp_width, mlp_width)
        self.w3, self.b3 = linear(keys[5], keys[6], mlp_width, 3)


@functools.partial(jax.jit, static_argnames=("sh_degree", "embed_dim", "tm"))
def _forward_impl(embeds, w1, b1, w2, b2, w3, b3, features, dirs, *,
                  sh_degree, embed_dim, tm):
    C, N, _ = dirs.shape
    E = embed_dim
    F = features.shape[-1]
    W = w2.shape[0]
    nb_use = (sh_degree + 1) ** 2

    # ---- tiny weight prep (no per-point HBM materialization of the concat input) ----
    # Merged layer-1 weight over the contiguous [feature | sh(:nb_use)] rows of w1;
    # unused SH bases multiply zeros in the reference, so they are simply dropped.
    w1_t = w1[E:E + F + nb_use].T.astype(jnp.bfloat16)                  # (W, F + nb_use)
    # Per-camera embedding contribution + b1 folded into one (C, W, 1) bias column.
    eb = (embeds @ w1[:E] + b1)[..., None].astype(jnp.float32)          # (C, W, 1)
    w2_t = w2.T.astype(jnp.bfloat16)                                    # (W, W)
    b2_t = b2.T.astype(jnp.float32)                                     # (W, 1)
    w3_t = w3.T.astype(jnp.bfloat16)                                    # (3, W)
    b3_t = b3.T.astype(jnp.float32)                                     # (3, 1)

    # ---- lane-dense ("feature-major") point data; transpose+pad+cast fuse under jit ----
    n_pad = pl.cdiv(N, tm) * tm
    feat_t = jnp.pad(features.T.astype(jnp.bfloat16),
                     ((0, 0), (0, n_pad - N)))                          # (F, n_pad)
    dirs_t = jnp.pad(jnp.transpose(dirs.astype(jnp.float32), (0, 2, 1)),
                     ((0, 0), (0, 0), (0, n_pad - N)))                  # (C, 3, n_pad)

    # Cameras innermost -> the feature block is revisited without re-DMA; the point-tile
    # axis is the megacore-sharded "parallel" axis (keeps feat reuse intact per core).
    grid = (n_pad // tm, C)

    kernel = functools.partial(_appearance_kernel,
                               num_bases_to_use=nb_use, feature_dim=F)

    flops = 2 * C * n_pad * (W * (F + nb_use) + W * W + 3 * W + 64)
    bytes_accessed = (C * n_pad * 3 * 4            # dirs in
                      + N * F * 2                  # features in (read once)
                      + C * n_pad * 3 * 4          # colors out
                      + C * W * 4 + (F + nb_use) * W * 2 + W * W * 2 + 3 * W * 2)
    cost = pl.CostEstimate(flops=int(flops),
                           transcendentals=int(C * n_pad),
                           bytes_accessed=int(bytes_accessed))

    out_t = pl.pallas_call(
        kernel,
        out_shape=jax.ShapeDtypeStruct((C, 3, n_pad), jnp.float32),
        grid_spec=pltpu.PrefetchScalarGridSpec(
            num_scalar_prefetch=0,
            grid=grid,
            in_specs=[
                pl.BlockSpec((None, 3, tm), lambda j, c: (c, 0, j)),    # dirs   (C, 3, n_pad)
                pl.BlockSpec((F, tm), lambda j, c: (0, j)),             # feats  (F, n_pad)
                pl.BlockSpec((None, W, 1), lambda j, c: (c, 0, 0)),     # per-cam bias (C, W, 1)
                pl.BlockSpec((W, F + nb_use), lambda j, c: (0, 0)),     # merged w1^T
                pl.BlockSpec((W, W), lambda j, c: (0, 0)),              # w2^T
                pl.BlockSpec((W, 1), lambda j, c: (0, 0)),              # b2^T
                pl.BlockSpec((3, W), lambda j, c: (0, 0)),              # w3^T
                pl.BlockSpec((3, 1), lambda j, c: (0, 0)),              # b3^T
            ],
            out_specs=pl.BlockSpec((None, 3, tm), lambda j, c: (c, 0, j)),
            scratch_shapes=[pltpu.VMEM((F + nb_use, tm), jnp.bfloat16)],  # fused [feat|SH]
        ),
        compiler_params=pltpu.CompilerParams(
            dimension_semantics=("parallel", "arbitrary"),
            vmem_limit_bytes=32 * 1024 * 1024,   # covers tm up to ~8K incl. v5e's 16 MiB default
        ),
        cost_estimate=cost,
    )(dirs_t, feat_t, eb, w1_t, w2_t, b2_t, w3_t, b3_t)

    # (C, 3, n_pad) -> (C, N, 3); slice + transpose fuse under jit.
    return jnp.transpose(out_t[:, :, :N], (0, 2, 1))


def appearance_forward(params: AppearanceOptParams, features, embed_ids, dirs,
                       sh_degree, tm=4096):
    """features: (N, feature_dim), embed_ids: (C,) int or None, dirs: (C, N, 3).

    Returns colors: (C, N, 3).
    """
    C, N, _ = dirs.shape
    E = params.embed_dim
    nb_use = (sh_degree + 1) ** 2
    assert nb_use <= (params.sh_degree + 1) ** 2

    if embed_ids is None:
        embeds = jnp.zeros((C, E), jnp.float32)
    else:
        embeds = params.embed_table[embed_ids].astype(jnp.float32)      # (C, E)

    # Large lane tile to amortize per-grid-step overhead; clamp for small N so the
    # padded overcompute stays bounded. Always a multiple of 128.
    tm_eff = _round_up(max(128, min(tm, _round_up(N, 512))), 128)

    return _forward_impl(embeds, params.w1, params.b1, params.w2, params.b2,
                         params.w3, params.b3, features, dirs,
                         sh_degree=sh_degree, embed_dim=E, tm=tm_eff)


def _reference_forward(params, features, embed_ids, dirs, sh_degree):
    """Pure-JAX f32 reference mirroring the torch module (for the sanity check)."""
    C, N, _ = dirs.shape
    E = params.embed_dim
    num_bases = (params.sh_degree + 1) ** 2
    nb_use = (sh_degree + 1) ** 2
    if embed_ids is None:
        embeds = jnp.zeros((C, E), jnp.float32)
    else:
        embeds = params.embed_table[embed_ids]
    embeds = jnp.broadcast_to(embeds[:, None, :], (C, N, E))
    feats = jnp.broadcast_to(features[None], (C, N, features.shape[-1]))
    norm = jnp.sqrt(jnp.sum(dirs * dirs, axis=-1, keepdims=True))
    dn = dirs / jnp.maximum(norm, 1e-12)
    x, y, z = dn[..., 0:1], dn[..., 1:2], dn[..., 2:3]
    cols = _sh_terms(x, y, z, nb_use)
    cols = cols + [jnp.zeros_like(x)] * (num_bases - nb_use)
    sh = jnp.concatenate(cols, axis=-1)
    h = jnp.concatenate([embeds, feats, sh], axis=-1)
    h1 = jnp.maximum(h @ params.w1 + params.b1[0], 0.0)
    h2 = jnp.maximum(h1 @ params.w2 + params.b2[0], 0.0)
    return h2 @ params.w3 + params.b3[0]


if __name__ == "__main__":
    key = jax.random.PRNGKey(0)
    k_feat, k_ids, k_dirs, k_param = jax.random.split(key, 4)

    # Small, module-consistent shapes. N deliberately not a tile multiple (exercises padding).
    n_embeddings = 8
    feature_dim = 32
    embed_dim = 16
    C, N = 2, 200

    params = AppearanceOptParams(
        n=n_embeddings, feature_dim=feature_dim, embed_dim=embed_dim,
        sh_degree=3, mlp_width=64, mlp_depth=2, key=k_param)

    features = jax.random.normal(k_feat, (N, feature_dim), jnp.float32)
    embed_ids = jax.random.randint(k_ids, (C,), 0, n_embeddings)
    dirs = jax.random.normal(k_dirs, (C, N, 3), jnp.float32)

    colors = appearance_forward(params, features, embed_ids, dirs, sh_degree=3)
    colors = jax.block_until_ready(colors)
    assert colors.shape == (C, N, 3)

    ref = _reference_forward(params, features, embed_ids, dirs, sh_degree=3)
    err = float(jnp.max(jnp.abs(colors - ref)))
    # bf16 MXU operands with f32 accumulation -> loosened tolerance vs the f32 reference.
    assert err < 5e-2, f"max abs err {err}"

    print("KERNEL_OK")
</pallas_src>

<mosaic_0001>
module attributes {stable_mosaic.version = 11 : i64} {
  func.func @_appearance_kernel(%arg0: i32, %arg1: i32, %arg2: memref<1x3x512xf32, #tpu.memory_space<vmem>>, %arg3: memref<32x512xbf16, #tpu.memory_space<vmem>>, %arg4: memref<1x64x1xf32, #tpu.memory_space<vmem>>, %arg5: memref<64x48xbf16, #tpu.memory_space<vmem>>, %arg6: memref<64x64xbf16, #tpu.memory_space<vmem>>, %arg7: memref<64x1xf32, #tpu.memory_space<vmem>>, %arg8: memref<3x64xbf16, #tpu.memory_space<vmem>>, %arg9: memref<3x1xf32, #tpu.memory_space<vmem>>, %arg10: memref<1x3x512xf32, #tpu.memory_space<vmem>>, %arg11: memref<48x512xbf16, #tpu.memory_space<vmem>>) attributes {dimension_semantics = [#tpu.dimension_semantics<parallel>, #tpu.dimension_semantics<arbitrary>], iteration_bounds = array<i64: 1, 2>, scalar_prefetch = 0 : i64, scratch_operands = 1 : i64, tpu.core_type = #tpu.core_type<tc>, window_params = [{transform_indices = @transform_0, window_bounds = array<i64: 1, 3, 512>}, {transform_indices = @transform_1, window_bounds = array<i64: 32, 512>}, {transform_indices = @transform_2, window_bounds = array<i64: 1, 64, 1>}, {pipeline_mode = #tpu.pipeline_mode<synchronous>, transform_indices = @transform_3, window_bounds = array<i64: 64, 48>}, {pipeline_mode = #tpu.pipeline_mode<synchronous>, transform_indices = @transform_4, window_bounds = array<i64: 64, 64>}, {pipeline_mode = #tpu.pipeline_mode<synchronous>, transform_indices = @transform_5, window_bounds = array<i64: 64, 1>}, {pipeline_mode = #tpu.pipeline_mode<synchronous>, transform_indices = @transform_6, window_bounds = array<i64: 3, 64>}, {pipeline_mode = #tpu.pipeline_mode<synchronous>, transform_indices = @transform_7, window_bounds = array<i64: 3, 1>}, {transform_indices = @transform_8, window_bounds = array<i64: 1, 3, 512>}]} {
    %c0_i32 = arith.constant 0 : i32
    %0 = arith.cmpi eq, %arg1, %c0_i32 : i32
    %1 = arith.extui %0 : i1 to i32
    %c0_i32_0 = arith.constant 0 : i32
    %2 = arith.cmpi ne, %1, %c0_i32_0 : i32
    scf.if %2 {
      %c0_49 = arith.constant 0 : index
      %c0_50 = arith.constant 0 : index
      %102 = vector.load %arg3[%c0_49, %c0_50] : memref<32x512xbf16, #tpu.memory_space<vmem>>, vector<32x512xbf16>
      %c0_51 = arith.constant 0 : index
      %c0_52 = arith.constant 0 : index
      %103 = vector.load %arg11[%c0_51, %c0_52] : memref<48x512xbf16, #tpu.memory_space<vmem>>, vector<32x512xbf16>
      tpu.vector_store %arg11[%c0_51, %c0_52], %102 {strides = array<i32>} : memref<48x512xbf16, #tpu.memory_space<vmem>>, vector<32x512xbf16>,
    } else {
    }
    %c0 = arith.constant 0 : index
    %c0_1 = arith.constant 0 : index
    %c0_2 = arith.constant 0 : index
    %3 = vector.load %arg2[%c0, %c0_1, %c0_2] : memref<1x3x512xf32, #tpu.memory_space<vmem>>, vector<1x1x512xf32>
    %4 = vector.shape_cast %3 : vector<1x1x512xf32> to vector<1x512xf32>
    %c0_3 = arith.constant 0 : index
    %c1 = arith.constant 1 : index
    %c0_4 = arith.constant 0 : index
    %5 = vector.load %arg2[%c0_3, %c1, %c0_4] : memref<1x3x512xf32, #tpu.memory_space<vmem>>, vector<1x1x512xf32>
    %6 = vector.shape_cast %5 : vector<1x1x512xf32> to vector<1x512xf32>
    %c0_5 = arith.constant 0 : index
    %c2 = arith.constant 2 : index
    %c0_6 = arith.constant 0 : index
    %7 = vector.load %arg2[%c0_5, %c2, %c0_6] : memref<1x3x512xf32, #tpu.memory_space<vmem>>, vector<1x1x512xf32>
    %8 = vector.shape_cast %7 : vector<1x1x512xf32> to vector<1x512xf32>
    %9 = arith.mulf %4, %4 : vector<1x512xf32>
    %10 = arith.mulf %6, %6 : vector<1x512xf32>
    %11 = arith.addf %9, %10 : vector<1x512xf32>
    %12 = arith.mulf %8, %8 : vector<1x512xf32>
    %13 = arith.addf %11, %12 : vector<1x512xf32>
    %cst = arith.constant 1.000000e-24 : f32
    %14 = vector.broadcast %cst : f32 to vector<1x512xf32>
    %15 = arith.maximumf %13, %14 : vector<1x512xf32>
    %16 = math.rsqrt %15 : vector<1x512xf32>
    %17 = arith.mulf %4, %16 : vector<1x512xf32>
    %18 = arith.mulf %6, %16 : vector<1x512xf32>
    %19 = arith.mulf %8, %16 : vector<1x512xf32>
    %cst_7 = arith.constant 1.000000e+00 : f32
    %20 = vector.broadcast %cst_7 : f32 to vector<1x512xf32>
    %cst_8 = arith.constant 0.282094806 : f32
    %21 = vector.broadcast %cst_8 : f32 to vector<1x512xf32>
    %22 = arith.mulf %21, %20 : vector<1x512xf32>
    %cst_9 = arith.constant -0.488602519 : f32
    %23 = vector.broadcast %cst_9 : f32 to vector<1x512xf32>
    %24 = arith.mulf %23, %18 : vector<1x512xf32>
    %cst_10 = arith.constant 0.488602519 : f32
    %25 = vector.broadcast %cst_10 : f32 to vector<1x512xf32>
    %26 = arith.mulf %25, %19 : vector<1x512xf32>
    %cst_11 = arith.constant -0.488602519 : f32
    %27 = vector.broadcast %cst_11 : f32 to vector<1x512xf32>
    %28 = arith.mulf %27, %17 : vector<1x512xf32>
    %29 = arith.mulf %19, %19 : vector<1x512xf32>
    %cst_12 = arith.constant -1.09254849 : f32
    %30 = vector.broadcast %cst_12 : f32 to vector<1x512xf32>
    %31 = arith.mulf %30, %19 : vector<1x512xf32>
    %32 = arith.mulf %17, %17 : vector<1x512xf32>
    %33 = arith.mulf %18, %18 : vector<1x512xf32>
    %34 = arith.subf %32, %33 : vector<1x512xf32>
    %cst_13 = arith.constant 2.000000e+00 : f32
    %35 = vector.broadcast %cst_13 : f32 to vector<1x512xf32>
    %36 = arith.mulf %35, %17 : vector<1x512xf32>
    %37 = arith.mulf %36, %18 : vector<1x512xf32>
    %cst_14 = arith.constant 0.546274245 : f32
    %38 = vector.broadcast %cst_14 : f32 to vector<1x512xf32>
    %39 = arith.mulf %38, %37 : vector<1x512xf32>
    %40 = arith.mulf %31, %18 : vector<1x512xf32>
    %cst_15 = arith.constant 0.946174681 : f32
    %41 = vector.broadcast %cst_15 : f32 to vector<1x512xf32>
    %42 = arith.mulf %41, %29 : vector<1x512xf32>
    %cst_16 = arith.constant 0.31539157 : f32
    %43 = vector.broadcast %cst_16 : f32 to vector<1x512xf32>
    %44 = arith.subf %42, %43 : vector<1x512xf32>
    %45 = arith.mulf %31, %17 : vector<1x512xf32>
    %cst_17 = arith.constant 0.546274245 : f32
    %46 = vector.broadcast %cst_17 : f32 to vector<1x512xf32>
    %47 = arith.mulf %46, %34 : vector<1x512xf32>
    %cst_18 = arith.constant -2.28522897 : f32
    %48 = vector.broadcast %cst_18 : f32 to vector<1x512xf32>
    %49 = arith.mulf %48, %29 : vector<1x512xf32>
    %cst_19 = arith.constant 0.457045794 : f32
    %50 = vector.broadcast %cst_19 : f32 to vector<1x512xf32>
    %51 = arith.addf %49, %50 : vector<1x512xf32>
    %cst_20 = arith.constant 1.44530571 : f32
    %52 = vector.broadcast %cst_20 : f32 to vector<1x512xf32>
    %53 = arith.mulf %52, %19 : vector<1x512xf32>
    %54 = arith.mulf %17, %34 : vector<1x512xf32>
    %55 = arith.mulf %18, %37 : vector<1x512xf32>
    %56 = arith.subf %54, %55 : vector<1x512xf32>
    %57 = arith.mulf %17, %37 : vector<1x512xf32>
    %58 = arith.mulf %18, %34 : vector<1x512xf32>
    %59 = arith.addf %57, %58 : vector<1x512xf32>
    %cst_21 = arith.constant -0.590043604 : f32
    %60 = vector.broadcast %cst_21 : f32 to vector<1x512xf32>
    %61 = arith.mulf %60, %59 : vector<1x512xf32>
    %62 = arith.mulf %53, %37 : vector<1x512xf32>
    %63 = arith.mulf %51, %18 : vector<1x512xf32>
    %cst_22 = arith.constant 1.86588168 : f32
    %64 = vector.broadcast %cst_22 : f32 to vector<1x512xf32>
    %65 = arith.mulf %64, %29 : vector<1x512xf32>
    %cst_23 = arith.constant 1.11952901 : f32
    %66 = vector.broadcast %cst_23 : f32 to vector<1x512xf32>
    %67 = arith.subf %65, %66 : vector<1x512xf32>
    %68 = arith.mulf %19, %67 : vector<1x512xf32>
    %69 = arith.mulf %51, %17 : vector<1x512xf32>
    %70 = arith.mulf %53, %34 : vector<1x512xf32>
    %cst_24 = arith.constant -0.590043604 : f32
    %71 = vector.broadcast %cst_24 : f32 to vector<1x512xf32>
    %72 = arith.mulf %71, %56 : vector<1x512xf32>
    %73 = tpu.concatenate %22, %24, %26, %28, %39, %40, %44, %45, %47, %61, %62, %63, %68, %69, %70, %72 in 0 : vector<1x512xf32>, vector<1x512xf32>, vector<1x512xf32>, vector<1x512xf32>, vector<1x512xf32>, vector<1x512xf32>, vector<1x512xf32>, vector<1x512xf32>, vector<1x512xf32>, vector<1x512xf32>, vector<1x512xf32>, vector<1x512xf32>, vector<1x512xf32>, vector<1x512xf32>, vector<1x512xf32>, vector<1x512xf32> -> vector<16x512xf32>
    %74 = arith.truncf %73 : vector<16x512xf32> to vector<16x512xbf16>
    %c32 = arith.constant 32 : index
    %c0_25 = arith.constant 0 : index
    %75 = vector.load %arg11[%c32, %c0_25] : memref<48x512xbf16, #tpu.memory_space<vmem>>, vector<16x512xbf16>
    tpu.vector_store %arg11[%c32, %c0_25], %74 {strides = array<i32>} : memref<48x512xbf16, #tpu.memory_space<vmem>>, vector<16x512xbf16>,
    %c0_26 = arith.constant 0 : index
    %c0_27 = arith.constant 0 : index
    %76 = vector.load %arg5[%c0_26, %c0_27] : memref<64x48xbf16, #tpu.memory_space<vmem>>, vector<64x48xbf16>
    %c0_28 = arith.constant 0 : index
    %c0_29 = arith.constant 0 : index
    %77 = vector.load %arg11[%c0_28, %c0_29] : memref<48x512xbf16, #tpu.memory_space<vmem>>, vector<48x512xbf16>
    %cst_30 = arith.constant dense<0.000000e+00> : vector<64x512xf32>
    %78 = tpu.matmul %76, %77, %cst_30 {dimension_numbers = #tpu.dot_dimension_numbers<[1], [0], [0], [1], [0, 0, 1, 1], [], []>} : vector<64x48xbf16>, vector<48x512xbf16>, vector<64x512xf32> -> vector<64x512xf32>
    %c0_31 = arith.constant 0 : index
    %c0_32 = arith.constant 0 : index
    %c0_33 = arith.constant 0 : index
    %79 = vector.load %arg4[%c0_31, %c0_32, %c0_33] : memref<1x64x1xf32, #tpu.memory_space<vmem>>, vector<1x64x1xf32>
    %80 = vector.shape_cast %79 : vector<1x64x1xf32> to vector<64x1xf32>
    %81 = vector.broadcast %80 : vector<64x1xf32> to vector<64x512xf32>
    %82 = arith.addf %78, %81 : vector<64x512xf32>
    %cst_34 = arith.constant 0.000000e+00 : f32
    %83 = vector.broadcast %cst_34 : f32 to vector<64x512xf32>
    %84 = arith.maximumf %82, %83 : vector<64x512xf32>
    %c0_35 = arith.constant 0 : index
    %c0_36 = arith.constant 0 : index
    %85 = vector.load %arg6[%c0_35, %c0_36] : memref<64x64xbf16, #tpu.memory_space<vmem>>, vector<64x64xbf16>
    %86 = arith.truncf %84 : vector<64x512xf32> to vector<64x512xbf16>
    %cst_37 = arith.constant dense<0.000000e+00> : vector<64x512xf32>
    %87 = tpu.matmul %85, %86, %cst_37 {dimension_numbers = #tpu.dot_dimension_numbers<[1], [0], [0], [1], [0, 0, 1, 1], [], []>} : vector<64x64xbf16>, vector<64x512xbf16>, vector<64x512xf32> -> vector<64x512xf32>
    %c0_38 = arith.constant 0 : index
    %c0_39 = arith.constant 0 : index
    %88 = vector.load %arg7[%c0_38, %c0_39] : memref<64x1xf32, #tpu.memory_space<vmem>>, vector<64x1xf32>
    %89 = vector.broadcast %88 : vector<64x1xf32> to vector<64x512xf32>
    %90 = arith.addf %87, %89 : vector<64x512xf32>
    %cst_40 = arith.constant 0.000000e+00 : f32
    %91 = vector.broadcast %cst_40 : f32 to vector<64x512xf32>
    %92 = arith.maximumf %90, %91 : vector<64x512xf32>
    %c0_41 = arith.constant 0 : index
    %c0_42 = arith.constant 0 : index
    %93 = vector.load %arg8[%c0_41, %c0_42] : memref<3x64xbf16, #tpu.memory_space<vmem>>, vector<3x64xbf16>
    %94 = arith.truncf %92 : vector<64x512xf32> to vector<64x512xbf16>
    %cst_43 = arith.constant dense<0.000000e+00> : vector<3x512xf32>
    %95 = tpu.matmul %93, %94, %cst_43 {dimension_numbers = #tpu.dot_dimension_numbers<[1], [0], [0], [1], [0, 0, 1, 1], [], []>} : vector<3x64xbf16>, vector<64x512xbf16>, vector<3x512xf32> -> vector<3x512xf32>
    %c0_44 = arith.constant 0 : index
    %c0_45 = arith.constant 0 : index
    %96 = vector.load %arg9[%c0_44, %c0_45] : memref<3x1xf32, #tpu.memory_space<vmem>>, vector<3x1xf32>
    %97 = vector.broadcast %96 : vector<3x1xf32> to vector<3x512xf32>
    %98 = arith.addf %95, %97 : vector<3x512xf32>
    %c0_46 = arith.constant 0 : index
    %c0_47 = arith.constant 0 : index
    %c0_48 = arith.constant 0 : index
    %99 = vector.load %arg10[%c0_46, %c0_47, %c0_48] : memref<1x3x512xf32, #tpu.memory_space<vmem>>, vector<1x3x512xf32>
    %100 = vector.shape_cast %99 : vector<1x3x512xf32> to vector<3x512xf32>
    %101 = vector.shape_cast %98 : vector<3x512xf32> to vector<1x3x512xf32>
    tpu.vector_store %arg10[%c0_46, %c0_47, %c0_48], %101 {strides = array<i32>} : memref<1x3x512xf32, #tpu.memory_space<vmem>>, vector<1x3x512xf32>,
    return
  }
  func.func @transform_0(%arg0: i32, %arg1: i32) -> (i32, i32, i32) {
    %c0_i32 = arith.constant 0 : i32
    %c0_i32_0 = arith.constant 0 : i32
    return %arg1, %c0_i32, %arg0 : i32, i32, i32
  }
  func.func @transform_1(%arg0: i32, %arg1: i32) -> (i32, i32) {
    %c0_i32 = arith.constant 0 : i32
    %c0_i32_0 = arith.constant 0 : i32
    return %c0_i32, %arg0 : i32, i32
  }
  func.func @transform_2(%arg0: i32, %arg1: i32) -> (i32, i32, i32) {
    %c0_i32 = arith.constant 0 : i32
    %c0_i32_0 = arith.constant 0 : i32
    %c0_i32_1 = arith.constant 0 : i32
    return %arg1, %c0_i32, %c0_i32_0 : i32, i32, i32
  }
  func.func @transform_3(%arg0: i32, %arg1: i32) -> (i32, i32) {
    %c0_i32 = arith.constant 0 : i32
    %c0_i32_0 = arith.constant 0 : i32
    %c0_i32_1 = arith.constant 0 : i32
    return %c0_i32, %c0_i32_0 : i32, i32
  }
  func.func @transform_4(%arg0: i32, %arg1: i32) -> (i32, i32) {
    %c0_i32 = arith.constant 0 : i32
    %c0_i32_0 = arith.constant 0 : i32
    %c0_i32_1 = arith.constant 0 : i32
    return %c0_i32, %c0_i32_0 : i32, i32
  }
  func.func @transform_5(%arg0: i32, %arg1: i32) -> (i32, i32) {
    %c0_i32 = arith.constant 0 : i32
    %c0_i32_0 = arith.constant 0 : i32
    %c0_i32_1 = arith.constant 0 : i32
    return %c0_i32, %c0_i32_0 : i32, i32
  }
  func.func @transform_6(%arg0: i32, %arg1: i32) -> (i32, i32) {
    %c0_i32 = arith.constant 0 : i32
    %c0_i32_0 = arith.constant 0 : i32
    %c0_i32_1 = arith.constant 0 : i32
    return %c0_i32, %c0_i32_0 : i32, i32
  }
  func.func @transform_7(%arg0: i32, %arg1: i32) -> (i32, i32) {
    %c0_i32 = arith.constant 0 : i32
    %c0_i32_0 = arith.constant 0 : i32
    %c0_i32_1 = arith.constant 0 : i32
    return %c0_i32, %c0_i32_0 : i32, i32
  }
  func.func @transform_8(%arg0: i32, %arg1: i32) -> (i32, i32, i32) {
    %c0_i32 = arith.constant 0 : i32
    %c0_i32_0 = arith.constant 0 : i32
    return %arg1, %c0_i32, %arg0 : i32, i32, i32
  }
}

</mosaic_0001>

<llo_original>
// kernel: _forward_impl.1
$region0: #{_forward_impl.1}
  #allocation0 [shape = 'u32[]', space=smem, size = 0x4, offset = 0x4, fixed_abs, tag = 'smem constant byte address 0x4 - core index']
  #allocation1 [shape = 'u32[72,128]{1,0:T(1,128)}', space=vmem, size = 0x9000, scoped, tag = 'internal scratch']
  #allocation2 [shape = 'bf16[48,512]{1,0:T(8,128)(2,1)}', space=vmem, size = 0xc000, scoped, tag = 'scratch operand']
  %s0 = inlined_call_operand.vmem [shape: f32[2,3,512], index: 0, kind: input, shape index: {}]
  %s1 = inlined_call_operand.vmem [shape: bf16[32,512], index: 1, kind: input, shape index: {}]
  %s2 = inlined_call_operand.vmem [shape: f32[2,64,1], index: 2, kind: input, shape index: {}]
  %s3 = inlined_call_operand.vmem [shape: bf16[64,48], index: 3, kind: input, shape index: {}]
  %s4 = inlined_call_operand.vmem [shape: bf16[64,64], index: 4, kind: input, shape index: {}]
  %s5 = inlined_call_operand.vmem [shape: f32[64,1], index: 5, kind: input, shape index: {}]
  %s6 = inlined_call_operand.vmem [shape: bf16[3,64], index: 6, kind: input, shape index: {}]
  %s7 = inlined_call_operand.vmem [shape: f32[3,1], index: 7, kind: input, shape index: {}]
  %s8 = inlined_call_operand.vmem [shape: f32[2,3,512], index: 8, kind: output, shape index: {}]
  %s9 = sld [smem:[#allocation0]]
  $region69: #{_forward_impl.1} parent=0
    _
  %s11 = ssub.s32 1, %s9
  %s12 = scalar_select 0, %s11, %s9
  loop: start=0, step=1, limit=4
  $region2: #{_forward_impl.1} parent=0 // loop_pre_header
    _
  $region3: #{_forward_impl.1} parent=0 // loop_header
    %s14 = sphi 0, %s18
    %p15 = scmp.ge.s32.totalorder %s14, 4
    %s21 = sphi 0, %s33
    %s22 = sphi 0, %s29
    %s23 = sphi 0, %s21
    %s24 = sphi 0, %s22
    %s25 = sphi 0, %s23
    %s26 = sphi 0, %s24
    %s38 = sphi 0, %s40
    %s41 = sphi 0, %s38
    %s42 = sphi 0, %s41
    %s58 = sphi 0, %s42
    %s64 = sphi 0, %s66
    %s67 = sphi 0, %s64
    %s68 = sphi 0, %s67
    %s84 = sphi 0, %s68
    %s90 = sphi 0, %s92
    %s93 = sphi 0, %s90
    %s94 = sphi 0, %s93
    %s110 = sphi 0, %s94
    %s114 = sphi 0, %s114
    %s116 = sphi 0, %s114
    %s117 = sphi 0, %s116
    %s131 = sphi 0, %s117
    %s135 = sphi 0, %s135
    %s137 = sphi 0, %s135
    %s138 = sphi 0, %s137
    %s152 = sphi 0, %s138
    %s156 = sphi 0, %s156
    %s158 = sphi 0, %s156
    %s159 = sphi 0, %s158
    %s173 = sphi 0, %s159
    %s177 = sphi 0, %s177
    %s179 = sphi 0, %s177
    %s180 = sphi 0, %s179
    %s194 = sphi 0, %s180
    %s198 = sphi 0, %s198
    %s200 = sphi 0, %s198
    %s201 = sphi 0, %s200
    %s215 = sphi 0, %s201
    %s223 = sphi 0, %s225
    %s226 = sphi 0, %s223
    %s227 = sphi 0, %s226
    %s243 = sphi 0, %s227
  $region4: #{_forward_impl.1} parent=0 // loop_header_branch
    %17 = sbr.rel (%p15) target = $region8
  $region5: #{_forward_impl.1} parent=0 // loop_body
    %s19 = ssub.s32 %s14, 1
    %s20 = ssub.s32 %s14, 2
    %s27 = sadd.s32 1, %s22
    %p28 = scmp.ge.s32.totalorder %s27, 2
    %s29 = scalar_select %p28, 0, %s27
    %s30 = sadd.s32 1, %s21
    %s31 = scalar_select %p28, %s30, %s21
    %p32 = scmp.ge.s32.totalorder %s31, 1
    %s33 = scalar_select %p32, 0, %s31
    %s34 = ssub.s32 %s22, %s29
    %s35 = ssub.s32 %s21, %s33
    %s36 = sor.u32 %s34, %s35
    %p37 = scmp.eq.s32.totalorder %s36, 0
    %s39 = sadd.s32 %s38, 1
    %s40 = scalar_select %p37, %s38, %s39
    %p43 = pneg %p37
    %p44 = scmp.eq.s32.totalorder %s14, 1
    %p45 = por %p43, %p44
    %p46 = scmp.ne.s32.totalorder %s38, %s41
    %p47 = scmp.eq.s32.totalorder %s14, 0
    %p48 = por %p46, %p47
    %p49 = scmp.ne.s32.totalorder %s38, %s41
    %p50 = scmp.eq.s32.totalorder %s19, 1
    %p51 = por %p49, %p50
    %p52 = scmp.ne.s32.totalorder %s41, %s42
    %p53 = scmp.eq.s32.totalorder %s19, 0
    %p54 = por %p52, %p53
    %p55 = scmp.ne.s32.totalorder %s41, %s42
    %p56 = scmp.eq.s32.totalorder %s20, 1
    %p57 = por %p55, %p56
    %p59 = scmp.ne.s32.totalorder %s42, %s58
    %p60 = scmp.eq.s32.totalorder %s20, 0
    %p61 = por %p59, %p60
    %s62 = ssub.s32 %s21, %s33
    %p63 = scmp.eq.s32.totalorder %s62, 0
    %s65 = sadd.s32 %s64, 1
    %s66 = scalar_select %p63, %s64, %s65
    %p69 = pneg %p63
    %p70 = scmp.eq.s32.totalorder %s14, 1
    %p71 = por %p69, %p70
    %p72 = scmp.ne.s32.totalorder %s64, %s67
    %p73 = scmp.eq.s32.totalorder %s14, 0
    %p74 = por %p72, %p73
    %p75 = scmp.ne.s32.totalorder %s64, %s67
    %p76 = scmp.eq.s32.totalorder %s19, 1
    %p77 = por %p75, %p76
    %p78 = scmp.ne.s32.totalorder %s67, %s68
    %p79 = scmp.eq.s32.totalorder %s19, 0
    %p80 = por %p78, %p79
    %p81 = scmp.ne.s32.totalorder %s67, %s68
    %p82 = scmp.eq.s32.totalorder %s20, 1
    %p83 = por %p81, %p82
    %p85 = scmp.ne.s32.totalorder %s68, %s84
    %p86 = scmp.eq.s32.totalorder %s20, 0
    %p87 = por %p85, %p86
    %s88 = ssub.s32 %s22, %s29
    %p89 = scmp.eq.s32.totalorder %s88, 0
    %s91 = sadd.s32 %s90, 1
    %s92 = scalar_select %p89, %s90, %s91
    %p95 = pneg %p89
    %p96 = scmp.eq.s32.totalorder %s14, 1
    %p97 = por %p95, %p96
    %p98 = scmp.ne.s32.totalorder %s90, %s93
    %p99 = scmp.eq.s32.totalorder %s14, 0
    %p100 = por %p98, %p99
    %p101 = scmp.ne.s32.totalorder %s90, %s93
    %p102 = scmp.eq.s32.totalorder %s19, 1
    %p103 = por %p101, %p102
    %p104 = scmp.ne.s32.totalorder %s93, %s94
    %p105 = scmp.eq.s32.totalorder %s19, 0
    %p106 = por %p104, %p105
    %p107 = scmp.ne.s32.totalorder %s93, %s94
    %p108 = scmp.eq.s32.totalorder %s20, 1
    %p109 = por %p107, %p108
    %p111 = scmp.ne.s32.totalorder %s94, %s110
    %p112 = scmp.eq.s32.totalorder %s20, 0
    %p113 = por %p111, %p112
    %s115 = sadd.s32 %s114, 1
    %p118 = scmp.eq.s32.totalorder %s14, 1
    %p119 = scmp.ne.s32.totalorder %s114, %s116
    %p120 = scmp.eq.s32.totalorder %s14, 0
    %p121 = por %p119, %p120
    %p122 = scmp.ne.s32.totalorder %s114, %s116
    %p123 = scmp.eq.s32.totalorder %s19, 1
    %p124 = por %p122, %p123
    %p125 = scmp.ne.s32.totalorder %s116, %s117
    %p126 = scmp.eq.s32.totalorder %s19, 0
    %p127 = por %p125, %p126
    %p128 = scmp.ne.s32.totalorder %s116, %s117
    %p129 = scmp.eq.s32.totalorder %s20, 1
    %p130 = por %p128, %p129
    %p132 = scmp.ne.s32.totalorder %s117, %s131
    %p133 = scmp.eq.s32.totalorder %s20, 0
    %p134 = por %p132, %p133
    %s136 = sadd.s32 %s135, 1
    %p139 = scmp.eq.s32.totalorder %s14, 1
    %p140 = scmp.ne.s32.totalorder %s135, %s137
    %p141 = scmp.eq.s32.totalorder %s14, 0
    %p142 = por %p140, %p141
    %p143 = scmp.ne.s32.totalorder %s135, %s137
    %p144 = scmp.eq.s32.totalorder %s19, 1
    %p145 = por %p143, %p144
    %p146 = scmp.ne.s32.totalorder %s137, %s138
    %p147 = scmp.eq.s32.totalorder %s19, 0
    %p148 = por %p146, %p147
    %p149 = scmp.ne.s32.totalorder %s137, %s138
    %p150 = scmp.eq.s32.totalorder %s20, 1
    %p151 = por %p149, %p150
    %p153 = scmp.ne.s32.totalorder %s138, %s152
    %p154 = scmp.eq.s32.totalorder %s20, 0
    %p155 = por %p153, %p154
    %s157 = sadd.s32 %s156, 1
    %p160 = scmp.eq.s32.totalorder %s14, 1
    %p161 = scmp.ne.s32.totalorder %s156, %s158
    %p162 = scmp.eq.s32.totalorder %s14, 0
    %p163 = por %p161, %p162
    %p164 = scmp.ne.s32.totalorder %s156, %s158
    %p165 = scmp.eq.s32.totalorder %s19, 1
    %p166 = por %p164, %p165
    %p167 = scmp.ne.s32.totalorder %s158, %s159
    %p168 = scmp.eq.s32.totalorder %s19, 0
    %p169 = por %p167, %p168
    %p170 = scmp.ne.s32.totalorder %s158, %s159
    %p171 = scmp.eq.s32.totalorder %s20, 1
    %p172 = por %p170, %p171
    %p174 = scmp.ne.s32.totalorder %s159, %s173
    %p175 = scmp.eq.s32.totalorder %s20, 0
    %p176 = por %p174, %p175
    %s178 = sadd.s32 %s177, 1
    %p181 = scmp.eq.s32.totalorder %s14, 1
    %p182 = scmp.ne.s32.totalorder %s177, %s179
    %p183 = scmp.eq.s32.totalorder %s14, 0
    %p184 = por %p182, %p183
    %p185 = scmp.ne.s32.totalorder %s177, %s179
    %p186 = scmp.eq.s32.totalorder %s19, 1
    %p187 = por %p185, %p186
    %p188 = scmp.ne.s32.totalorder %s179, %s180
    %p189 = scmp.eq.s32.totalorder %s19, 0
    %p190 = por %p188, %p189
    %p191 = scmp.ne.s32.totalorder %s179, %s180
    %p192 = scmp.eq.s32.totalorder %s20, 1
    %p193 = por %p191, %p192
    %p195 = scmp.ne.s32.totalorder %s180, %s194
    %p196 = scmp.eq.s32.totalorder %s20, 0
    %p197 = por %p195, %p196
    %s199 = sadd.s32 %s198, 1
    %p202 = scmp.eq.s32.totalorder %s14, 1
    %p203 = scmp.ne.s32.totalorder %s198, %s200
    %p204 = scmp.eq.s32.totalorder %s14, 0
    %p205 = por %p203, %p204
    %p206 = scmp.ne.s32.totalorder %s198, %s200
    %p207 = scmp.eq.s32.totalorder %s19, 1
    %p208 = por %p206, %p207
    %p209 = scmp.ne.s32.totalorder %s200, %s201
    %p210 = scmp.eq.s32.totalorder %s19, 0
    %p211 = por %p209, %p210
    %p212 = scmp.ne.s32.totalorder %s200, %s201
    %p213 = scmp.eq.s32.totalorder %s20, 1
    %p214 = por %p212, %p213
    %p216 = scmp.ne.s32.totalorder %s201, %s215
    %p217 = scmp.eq.s32.totalorder %s20, 0
    %p218 = por %p216, %p217
    %s219 = ssub.s32 %s22, %s29
    %s220 = ssub.s32 %s21, %s33
    %s221 = sor.u32 %s219, %s220
    %p222 = scmp.eq.s32.totalorder %s221, 0
    %s224 = sadd.s32 %s223, 1
    %s225 = scalar_select %p222, %s223, %s224
    %p228 = pneg %p222
    %p229 = scmp.eq.s32.totalorder %s14, 1
    %p230 = por %p228, %p229
    %p231 = scmp.ne.s32.totalorder %s223, %s226
    %p232 = scmp.eq.s32.totalorder %s14, 0
    %p233 = por %p231, %p232
    %p234 = scmp.ne.s32.totalorder %s223, %s226
    %p235 = scmp.eq.s32.totalorder %s19, 1
    %p236 = por %p234, %p235
    %p237 = scmp.ne.s32.totalorder %s226, %s227
    %p238 = scmp.eq.s32.totalorder %s19, 0
    %p239 = por %p237, %p238
    %p240 = scmp.ne.s32.totalorder %s226, %s227
    %p241 = scmp.eq.s32.totalorder %s20, 1
    %p242 = por %p240, %p241
    %p244 = scmp.ne.s32.totalorder %s227, %s243
    %p245 = scmp.eq.s32.totalorder %s20, 0
    %p246 = por %p244, %p245
    %p247 = scmp.le.s32.totalorder 1, %s14
    %p248 = scmp.lt.s32.totalorder %s14, 3
    %p249 = pnand %p247, %p248
    %p250 = pneg %p249
    // Predicated region
    $region9: #{_forward_impl.1} parent=5 // pred_check
      _
    $region10: #{_forward_impl.1} parent=5 // pred_check_branch
      %252 = sbr.rel (%p249) target = $region12
    $region11: #{_forward_impl.1} parent=5 // pred_region
      %s253 = ssub.s32 %s14, 1
      // Predicated region
      $region13: #{_forward_impl.1} parent=11 // pred_check
        %p254 = pneg %p80
      $region14: #{_forward_impl.1} parent=11 // pred_check_branch
        %256 = sbr.rel (%p254) target = $region16
      $region15: #{_forward_impl.1} parent=11 // pred_region
        %s257 = smul.u32 4, %s23
        %p258 = scmp.lt.s32.totalorder %s257, 3
        %s259 = scalar_select %p258, %s257, 3
        %s260 = smul.addr %s259, 4
        %s261 = scalar_lea.vmem %s1, %s260
        %s262 = smul.u32 4, %s23
      $region16: #{_forward_impl.1} parent=11 // pred_fallthru
        _
      // Predicated region
      $region17: #{_forward_impl.1} parent=11 // pred_check
        %p263 = pneg %p127
      $region18: #{_forward_impl.1} parent=11 // pred_check_branch
        %265 = sbr.rel (%p263) target = $region20
      $region19: #{_forward_impl.1} parent=11 // pred_region
        _
      $region20: #{_forward_impl.1} parent=11 // pred_fallthru
        _
      // Predicated region
      $region21: #{_forward_impl.1} parent=11 // pred_check
        %p266 = pneg %p148
      $region22: #{_forward_impl.1} parent=11 // pred_check_branch
        %268 = sbr.rel (%p266) target = $region24
      $region23: #{_forward_impl.1} parent=11 // pred_region
        _
      $region24: #{_forward_impl.1} parent=11 // pred_fallthru
        _
      // Predicated region
      $region25: #{_forward_impl.1} parent=11 // pred_check
        %p269 = pneg %p169
      $region26: #{_forward_impl.1} parent=11 // pred_check_branch
        %271 = sbr.rel (%p269) target = $region28
      $region27: #{_forward_impl.1} parent=11 // pred_region
        _
      $region28: #{_forward_impl.1} parent=11 // pred_fallthru
        _
      // Predicated region
      $region29: #{_forward_impl.1} parent=11 // pred_check
        %p272 = pneg %p190
      $region30: #{_forward_impl.1} parent=11 // pred_check_branch
        %274 = sbr.rel (%p272) target = $region32
      $region31: #{_forward_impl.1} parent=11 // pred_region
        _
      $region32: #{_forward_impl.1} parent=11 // pred_fallthru
        _
      // Predicated region
      $region33: #{_forward_impl.1} parent=11 // pred_check
        %p275 = pneg %p211
      $region34: #{_forward_impl.1} parent=11 // pred_check_branch
        %277 = sbr.rel (%p275) target = $region36
      $region35: #{_forward_impl.1} parent=11 // pred_region
        _
      $region36: #{_forward_impl.1} parent=11 // pred_fallthru
        _
    $region12: #{_forward_impl.1} parent=5 // pred_fallthru
      _
    %p278 = scmp.lt.s32.totalorder %s14, 2
    // Predicated region
    $region37: #{_forward_impl.1} parent=5 // pred_check
      %p279 = pneg %p278
    $region38: #{_forward_impl.1} parent=5 // pred_check_branch
      %281 = sbr.rel (%p279) target = $region40
    $region39: #{_forward_impl.1} parent=5 // pred_region
      // Predicated region
      $region41: #{_forward_impl.1} parent=39 // pred_check
        %p282 = pneg %p48
      $region42: #{_forward_impl.1} parent=39 // pred_check_branch
        %284 = sbr.rel (%p282) target = $region44
      $region43: #{_forward_impl.1} parent=39 // pred_region
        %s285 = smul.u32 4, %s21
        %p286 = scmp.lt.s32.totalorder %s22, 1
        %s287 = scalar_select %p286, %s22, 1
        %p288 = scmp.lt.s32.totalorder %s285, 3
        %s289 = scalar_select %p288, %s285, 3
        %s290 = smul.addr %s287, 4
        %s291 = sadd.s32 %s289, %s290
        %s292 = smul.addr %s291, 4
        %s293 = scalar_lea.vmem %s0, %s292
        %s294 = smul.u32 4, %s21
      $region44: #{_forward_impl.1} parent=39 // pred_fallthru
        _
      // Predicated region
      $region45: #{_forward_impl.1} parent=39 // pred_check
        %p295 = pneg %p100
      $region46: #{_forward_impl.1} parent=39 // pred_check_branch
        %297 = sbr.rel (%p295) target = $region48
      $region47: #{_forward_impl.1} parent=39 // pred_region
        %p298 = scmp.lt.s32.totalorder %s22, 1
        %s299 = scalar_select %p298, %s22, 1
        %s300 = smul.addr %s299, 8
        %s301 = smul.addr %s300, 8
        %s302 = scalar_lea.vmem %s2, %s301
      $region48: #{_forward_impl.1} parent=39 // pred_fallthru
        _
    $region40: #{_forward_impl.1} parent=5 // pred_fallthru
      _
    %p303 = scmp.le.s32.totalorder 1, %s14
    %p304 = scmp.lt.s32.totalorder %s14, 3
    %p305 = pnand %p303, %p304
    %p306 = pneg %p305
    // Predicated region
    $region49: #{_forward_impl.1} parent=5 // pred_check
      _
    $region50: #{_forward_impl.1} parent=5 // pred_check_branch
      %308 = sbr.rel (%p305) target = $region52
    $region51: #{_forward_impl.1} parent=5 // pred_region
      %s309 = ssub.s32 %s14, 1
      %s310 = smul.u32 4, %s23
      %p311 = scmp.lt.s32.totalorder %s24, 1
      %s312 = scalar_select %p311, %s24, 1
      %p313 = scmp.lt.s32.totalorder %s310, 3
      %s314 = scalar_select %p313, %s310, 3
      %s315 = smul.addr %s312, 4
      %s316 = sadd.s32 %s314, %s315
      %s317 = smul.addr %s316, 4
      %s318 = scalar_lea.vmem %s0, %s317
      %p319 = pneg %p54
      %p320 = pneg %p51
      %s321 = smul.u32 4, %s23
      %p322 = scmp.lt.s32.totalorder %s321, 3
      %s323 = scalar_select %p322, %s321, 3
      %s324 = smul.addr %s323, 4
      %s325 = scalar_lea.vmem %s1, %s324
      %p326 = pneg %p80
      %p327 = pneg %p77
      %p328 = scmp.lt.s32.totalorder %s24, 1
      %s329 = scalar_select %p328, %s24, 1
      %s330 = smul.addr %s329, 8
      %s331 = smul.addr %s330, 8
      %s332 = scalar_lea.vmem %s2, %s331
      %p333 = pneg %p106
      %p334 = pneg %p103
      %p335 = pneg %p127
      %p336 = pneg %p124
      %p337 = pneg %p148
      %p338 = pneg %p145
      %p339 = pneg %p169
      %p340 = pneg %p166
      %p341 = pneg %p190
      %p342 = pneg %p187
      %p343 = pneg %p211
      %p344 = pneg %p208
      %p345 = pneg %p239
      %p346 = pneg %p236
      %s347 = smul.u32 4, %s23
      %p348 = scmp.lt.s32.totalorder %s24, 1
      %s349 = scalar_select %p348, %s24, 1
      %p350 = scmp.lt.s32.totalorder %s347, 3
      %s351 = scalar_select %p350, %s347, 3
      %s352 = smul.addr %s349, 4
      %s353 = sadd.s32 %s351, %s352
      %s354 = smul.addr %s353, 4
      %s355 = scalar_lea.vmem %s8, %s354
      %s356 = smul.u32 4, %s23
      %p357 = scmp.lt.s32.totalorder %s24, 1
      %s358 = scalar_select %p357, %s24, 1
      %p359 = scmp.lt.s32.totalorder %s356, 3
      %s360 = scalar_select %p359, %s356, 3
      %s361 = smul.addr %s358, 4
      %s362 = sadd.s32 %s360, %s361
      %s363 = smul.addr %s362, 4
      %s364 = scalar_lea.vmem %s0, %s363
      %s365 = smul.u32 4, %s23
      %s366 = smul.u32 4, %s23
      %p367 = scmp.lt.s32.totalorder %s366, 3
      %s368 = scalar_select %p367, %s366, 3
      %s369 = smul.addr %s368, 4
      %s370 = scalar_lea.vmem %s1, %s369
      %s371 = smul.u32 4, %s23
      %p372 = scmp.lt.s32.totalorder %s24, 1
      %s373 = scalar_select %p372, %s24, 1
      %s374 = smul.addr %s373, 8
      %s375 = smul.addr %s374, 8
      %s376 = scalar_lea.vmem %s2, %s375
      %s377 = smul.u32 4, %s23
      %p378 = scmp.lt.s32.totalorder %s24, 1
      %s379 = scalar_select %p378, %s24, 1
      %p380 = scmp.lt.s32.totalorder %s377, 3
      %s381 = scalar_select %p380, %s377, 3
      %s382 = smul.addr %s379, 4
      %s383 = sadd.s32 %s381, %s382
      %s384 = smul.addr %s383, 4
      %s385 = scalar_lea.vmem %s8, %s384
      %s386 = smul.u32 4, %s23
      %p388 = scmp.eq.s32.totalorder %s24, 0
      // Predicated region
      $region53: #{_forward_impl.1} parent=51 // pred_check
        %p389 = pneg %p388
      $region54: #{_forward_impl.1} parent=51 // pred_check_branch
        %391 = sbr.rel (%p389) target = $region56
      $region55: #{_forward_impl.1} parent=51 // pred_region
        %v392 = vld [vmem:[%s370] sm:$0xff]
        %v393 = vld [vmem:[%s370 + $0x8] sm:$0xff]
        %v394 = vld [vmem:[%s370 + $0x10] sm:$0xff]
        %v395 = vld [vmem:[%s370 + $0x18] sm:$0xff]
        %v396 = vld [vmem:[%s370 + $0x20] sm:$0xff]
        %v397 = vld [vmem:[%s370 + $0x28] sm:$0xff]
        %v398 = vld [vmem:[%s370 + $0x30] sm:$0xff]
        %v399 = vld [vmem:[%s370 + $0x38] sm:$0xff]
        %400 = vst [vmem:[#allocation2] sm:$0xff] %v392
        %401 = vst [vmem:[#allocation2 + $0x8] sm:$0xff] %v393
        %402 = vst [vmem:[#allocation2 + $0x10] sm:$0xff] %v394
        %403 = vst [vmem:[#allocation2 + $0x18] sm:$0xff] %v395
        %404 = vst [vmem:[#allocation2 + $0x20] sm:$0xff] %v396
        %405 = vst [vmem:[#allocation2 + $0x28] sm:$0xff] %v397
        %406 = vst [vmem:[#allocation2 + $0x30] sm:$0xff] %v398
        %407 = vst [vmem:[#allocation2 + $0x38] sm:$0xff] %v399
      $region56: #{_forward_impl.1} parent=51 // pred_fallthru
        _
      %v408 = vld [vmem:[%s364] ss:$4 sm:$0xf]
      %s409 = scalar_lea.vmem %s364, 1
      %v410 = vld [vmem:[%s409] ss:$4 sm:$0xf]
      %s411 = scalar_lea.vmem %s364, 2
      %v412 = vld [vmem:[%s411] ss:$4 sm:$0xf]
      %v413 = vmul.f32 %v408, %v408
      %v414 = vmul.f32 %v410, %v410
      %v415 = vadd.f32 %v413, %v414
      %v416 = vmul.f32 %v412, %v412
      %v417 = vadd.f32 %v415, %v416
      %v418 = vmax.f32 %v417, 1e-24
      %v419 = vrsqrt.pop %v418
      %v420 = vmul.f32 %v419, %v418
      %v421 = vmul.f32 %v420, %v419
      %v422 = vmul.f32 0.5, %v421
      %v423 = vsub.f32 1.5, %v422
      %v424 = vmul.f32 %v419, %v423
      %vm425 = vweird.f32 %v418
      %vm426 = vweird.f32 %v419
      %vm427 = vmor %vm425, %vm426
      %v428 = vsel %vm427, %v419, %v424
      %v429 = vmul.f32 %v408, %v428
      %v430 = vmul.f32 %v410, %v428
      %v431 = vmul.f32 %v412, %v428
      %v432 = vmul.f32 %v430, -0.48860252
      %v433 = vmul.f32 %v431, 0.48860252
      %v434 = vmul.f32 %v429, -0.48860252
      %v435 = vmul.f32 %v431, %v431
      %v436 = vmul.f32 %v431, -1.0925485
      %v437 = vmul.f32 %v429, %v429
      %v438 = vmul.f32 %v430, %v430
      %v439 = vsub.f32 %v437, %v438
      %v440 = vmul.f32 %v429, 2.0
      %v441 = vmul.f32 %v440, %v430
      %v442 = vmul.f32 %v441, 0.54627424
      %v443 = vmul.f32 %v436, %v430
      %v444 = vmul.f32 %v435, 0.9461747
      %v445 = vsub.f32 %v444, 0.31539157
      %v446 = vmul.f32 %v436, %v429
      %v447 = vmul.f32 %v439, 0.54627424
      %v448 = vmul.f32 %v435, -2.285229
      %v449 = vadd.f32 %v448, 0.4570458
      %v450 = vmul.f32 %v431, 1.4453057
      %v451 = vmul.f32 %v429, %v439
      %v452 = vmul.f32 %v430, %v441
      %v453 = vsub.f32 %v451, %v452
      %v454 = vmul.f32 %v429, %v441
      %v455 = vmul.f32 %v430, %v439
      %v456 = vadd.f32 %v454, %v455
      %v457 = vmul.f32 %v456, -0.5900436
      %v458 = vmul.f32 %v450, %v441
      %v459 = vmul.f32 %v449, %v430
      %v460 = vmul.f32 %v435, 1.8658817
      %v461 = vsub.f32 %v460, 1.119529
      %v462 = vmul.f32 %v431, %v461
      %v463 = vmul.f32 %v449, %v429
      %v464 = vmul.f32 %v450, %v439
      %v465 = vmul.f32 %v453, -0.5900436
      %v467 = vperm.slane %v432, 0
      %v468 = vperm.slane %v432, 1
      %v469 = vperm.slane %v432, 2
      %v470 = vperm.slane %v432, 3
      %v476 = vperm.slane %v433, 0
      %v477 = vperm.slane %v433, 1
      %v478 = vperm.slane %v433, 2
      %v479 = vperm.slane %v433, 3
      %v485 = vperm.slane %v434, 0
      %v486 = vperm.slane %v434, 1
      %v487 = vperm.slane %v434, 2
      %v488 = vperm.slane %v434, 3
      %v494 = vperm.slane %v442, 0
      %v495 = vperm.slane %v442, 1
      %v496 = vperm.slane %v442, 2
      %v497 = vperm.slane %v442, 3
      %v503 = vperm.slane %v443, 0
      %v504 = vperm.slane %v443, 1
      %v505 = vperm.slane %v443, 2
      %v506 = vperm.slane %v443, 3
      %v512 = vperm.slane %v445, 0
      %v513 = vperm.slane %v445, 1
      %v514 = vperm.slane %v445, 2
      %v515 = vperm.slane %v445, 3
      %v521 = vperm.slane %v446, 0
      %v522 = vperm.slane %v446, 1
      %v523 = vperm.slane %v446, 2
      %v524 = vperm.slane %v446, 3
      %v530 = vperm.slane %v447, 0
      %v531 = vperm.slane %v447, 1
      %v532 = vperm.slane %v447, 2
      %v533 = vperm.slane %v447, 3
      %v539 = vperm.slane %v457, 0
      %v540 = vperm.slane %v457, 1
      %v541 = vperm.slane %v457, 2
      %v542 = vperm.slane %v457, 3
      %v548 = vperm.slane %v458, 0
      %v549 = vperm.slane %v458, 1
      %v550 = vperm.slane %v458, 2
      %v551 = vperm.slane %v458, 3
      %v557 = vperm.slane %v459, 0
      %v558 = vperm.slane %v459, 1
      %v559 = vperm.slane %v459, 2
      %v560 = vperm.slane %v459, 3
      %v566 = vperm.slane %v462, 0
      %v567 = vperm.slane %v462, 1
      %v568 = vperm.slane %v462, 2
      %v569 = vperm.slane %v462, 3
      %v575 = vperm.slane %v463, 0
      %v576 = vperm.slane %v463, 1
      %v577 = vperm.slane %v463, 2
      %v578 = vperm.slane %v463, 3
      %v584 = vperm.slane %v464, 0
      %v585 = vperm.slane %v464, 1
      %v586 = vperm.slane %v464, 2
      %v587 = vperm.slane %v464, 3
      %v593 = vperm.slane %v465, 0
      %v594 = vperm.slane %v465, 1
      %v595 = vperm.slane %v465, 2
      %v596 = vperm.slane %v465, 3
      %vm601 = vcmask 1040384
      %v602 = vsel %vm601, 0.2820948, %v467
      %v603 = vsel %vm601, 0.2820948, %v468
      %v604 = vsel %vm601, 0.2820948, %v469
      %v605 = vsel %vm601, 0.2820948, %v470
      %vm606 = vcmask 1041408
      %v607 = vsel %vm606, %v602, %v476
      %v608 = vsel %vm606, %v603, %v477
      %v609 = vsel %vm606, %v604, %v478
      %v610 = vsel %vm606, %v605, %v479
      %vm611 = vcmask 1042432
      %v612 = vsel %vm611, %v607, %v485
      %v613 = vsel %vm611, %v608, %v486
      %v614 = vsel %vm611, %v609, %v487
      %v615 = vsel %vm611, %v610, %v488
      %vm616 = vcmask 1043456
      %v617 = vsel %vm616, %v612, %v494
      %v618 = vsel %vm616, %v613, %v495
      %v619 = vsel %vm616, %v614, %v496
      %v620 = vsel %vm616, %v615, %v497
      %vm621 = vcmask 1044480
      %v622 = vsel %vm621, %v617, %v503
      %v623 = vsel %vm621, %v618, %v504
      %v624 = vsel %vm621, %v619, %v505
      %v625 = vsel %vm621, %v620, %v506
      %vm626 = vcmask 1045504
      %v627 = vsel %vm626, %v622, %v512
      %v628 = vsel %vm626, %v623, %v513
      %v629 = vsel %vm626, %v624, %v514
      %v630 = vsel %vm626, %v625, %v515
      %vm631 = vcmask 1046528
      %v632 = vsel %vm631, %v627, %v521
      %v633 = vsel %vm631, %v628, %v522
      %v634 = vsel %vm631, %v629, %v523
      %v635 = vsel %vm631, %v630, %v524
      %v636 = vsel %vm601, %v530, %v539
      %v637 = vsel %vm601, %v531, %v540
      %v638 = vsel %vm601, %v532, %v541
      %v639 = vsel %vm601, %v533, %v542
      %v640 = vsel %vm606, %v636, %v548
      %v641 = vsel %vm606, %v637, %v549
      %v642 = vsel %vm606, %v638, %v550
      %v643 = vsel %vm606, %v639, %v551
      %v644 = vsel %vm611, %v640, %v557
      %v645 = vsel %vm611, %v641, %v558
      %v646 = vsel %vm611, %v642, %v559
      %v647 = vsel %vm611, %v643, %v560
      %v648 = vsel %vm616, %v644, %v566
      %v649 = vsel %vm616, %v645, %v567
      %v650 = vsel %vm616, %v646, %v568
      %v651 = vsel %vm616, %v647, %v569
      %v652 = vsel %vm621, %v648, %v575
      %v653 = vsel %vm621, %v649, %v576
      %v654 = vsel %vm621, %v650, %v577
      %v655 = vsel %vm621, %v651, %v578
      %v656 = vsel %vm626, %v652, %v584
      %v657 = vsel %vm626, %v653, %v585
      %v658 = vsel %vm626, %v654, %v586
      %v659 = vsel %vm626, %v655, %v587
      %v660 = vsel %vm631, %v656, %v593
      %v661 = vsel %vm631, %v657, %v594
      %v662 = vsel %vm631, %v658, %v595
      %v663 = vsel %vm631, %v659, %v596
      %v664 = vpack.c.bf16 %v633, %v632
      %v665 = vpack.c.bf16 %v635, %v634
      %v666 = vpack.c.bf16 %v661, %v660
      %v667 = vpack.c.bf16 %v663, %v662
      %668 = vst [vmem:[#allocation2 + $0x40] sm:$0xff] %v664
      %669 = vst [vmem:[#allocation2 + $0x48] sm:$0xff] %v665
      %670 = vst [vmem:[#allocation2 + $0x50] sm:$0xff] %v666
      %671 = vst [vmem:[#allocation2 + $0x58] sm:$0xff] %v667
      %v672 = vld [vmem:[%s3] sm:$0xf]
      %v673 = vld [vmem:[%s3 + $0x4] sm:$0xf]
      %v674 = vld [vmem:[%s3 + $0x8] sm:$0xf]
      %v675 = vld [vmem:[%s3 + $0xc] sm:$0xf]
      %v676 = vld [vmem:[%s3 + $0x10] sm:$0xf]
      %v677 = vld [vmem:[%s3 + $0x14] sm:$0xf]
      %v678 = vld [vmem:[%s3 + $0x18] sm:$0xf]
      %v679 = vld [vmem:[%s3 + $0x1c] sm:$0xf]
      %v680 = vld [vmem:[#allocation2] sm:$0xff]
      %v681 = vld [vmem:[#allocation2 + $0x8] sm:$0xff]
      %v682 = vld [vmem:[#allocation2 + $0x10] sm:$0xff]
      %v683 = vld [vmem:[#allocation2 + $0x18] sm:$0xff]
      %v684 = vld [vmem:[#allocation2 + $0x20] sm:$0xff]
      %v685 = vld [vmem:[#allocation2 + $0x28] sm:$0xff]
      %v686 = vld [vmem:[#allocation2 + $0x30] sm:$0xff]
      %v687 = vld [vmem:[#allocation2 + $0x38] sm:$0xff]
      %v688 = vld [vmem:[#allocation2 + $0x40] sm:$0xff]
      %v689 = vld [vmem:[#allocation2 + $0x48] sm:$0xff]
      %v690 = vld [vmem:[#allocation2 + $0x50] sm:$0xff]
      %v691 = vld [vmem:[#allocation2 + $0x58] sm:$0xff]
      %v692 = vld [vmem:[%s376] sm:$0xff]
      %v693 = vld [vmem:[%s376 + $0x8] sm:$0xff]
      %v694 = vld [vmem:[%s376 + $0x10] sm:$0xff]
      %v695 = vld [vmem:[%s376 + $0x18] sm:$0xff]
      %v696 = vld [vmem:[%s376 + $0x20] sm:$0xff]
      %v697 = vld [vmem:[%s376 + $0x28] sm:$0xff]
      %v698 = vld [vmem:[%s376 + $0x30] sm:$0xff]
      %v699 = vld [vmem:[%s376 + $0x38] sm:$0xff]
      %701 = vset.pattern.permute.xlu0 0
      %702 = vperm.xlu0 %701, %v692
      %v703 = vpop.permute.xlu0 %702
      %706 = vset.pattern.permute.xlu0 0
      %707 = vperm.xlu0 %706, %v693
      %v708 = vpop.permute.xlu0 %707
      %711 = vset.pattern.permute.xlu0 0
      %712 = vperm.xlu0 %711, %v694
      %v713 = vpop.permute.xlu0 %712
      %716 = vset.pattern.permute.xlu0 0
      %717 = vperm.xlu0 %716, %v695
      %v718 = vpop.permute.xlu0 %717
      %721 = vset.pattern.permute.xlu0 0
      %722 = vperm.xlu0 %721, %v696
      %v723 = vpop.permute.xlu0 %722
      %726 = vset.pattern.permute.xlu0 0
      %727 = vperm.xlu0 %726, %v697
      %v728 = vpop.permute.xlu0 %727
      %731 = vset.pattern.permute.xlu0 0
      %732 = vperm.xlu0 %731, %v698
      %v733 = vpop.permute.xlu0 %732
      %736 = vset.pattern.permute.xlu0 0
      %737 = vperm.xlu0 %736, %v699
      %v738 = vpop.permute.xlu0 %737
      %v748 = vunpack.c.l.b16 %v672
      %v749 = vunpack.c.l.b16 %v673
      %v750 = vunpack.c.l.b16 %v674
      %v751 = vunpack.c.l.b16 %v675
      %v752 = vunpack.c.l.b16 %v676
      %v753 = vunpack.c.l.b16 %v677
      %v754 = vunpack.c.l.b16 %v678
      %v755 = vunpack.c.l.b16 %v679
      %v756 = vpack.c.b16 %v749, %v748
      %v757 = vpack.c.b16 %v751, %v750
      %v758 = vpack.c.b16 %v753, %v752
      %v759 = vpack.c.b16 %v755, %v754
      %v772 = vunpack.c.l.b16 %v680
      %v773 = vunpack.c.h.b16 %v680
      %v774 = vunpack.c.l.b16 %v681
      %v775 = vunpack.c.h.b16 %v681
      %v776 = vunpack.c.l.b16 %v682
      %v777 = vunpack.c.h.b16 %v682
      %v778 = vunpack.c.l.b16 %v683
      %v779 = vunpack.c.h.b16 %v683
      %v780 = vunpack.c.l.b16 %v684
      %v781 = vunpack.c.h.b16 %v684
      %v782 = vunpack.c.l.b16 %v685
      %v783 = vunpack.c.h.b16 %v685
      %v784 = vunpack.c.l.b16 %v686
      %v785 = vunpack.c.h.b16 %v686
      %v786 = vunpack.c.l.b16 %v687
      %v787 = vunpack.c.h.b16 %v687
      %v788 = vunpack.c.l.b16 %v688
      %v789 = vunpack.c.h.b16 %v688
      %v790 = vunpack.c.l.b16 %v689
      %v791 = vunpack.c.h.b16 %v689
      %v792 = vunpack.c.l.b16 %v690
      %v793 = vunpack.c.h.b16 %v690
      %v794 = vunpack.c.l.b16 %v691
      %v795 = vunpack.c.h.b16 %v691
      %v796 = vpack.c.b16 %v776, %v772
      %v797 = vpack.c.b16 %v777, %v773
      %v798 = vpack.c.b16 %v778, %v774
      %v799 = vpack.c.b16 %v779, %v775
      %v800 = vpack.c.b16 %v784, %v780
      %v801 = vpack.c.b16 %v785, %v781
      %v802 = vpack.c.b16 %v786, %v782
      %v803 = vpack.c.b16 %v787, %v783
      %v804 = vpack.c.b16 %v792, %v788
      %v805 = vpack.c.b16 %v793, %v789
      %v806 = vpack.c.b16 %v794, %v790
      %v807 = vpack.c.b16 %v795, %v791
      %vm820 = vcmask 392192
      %v822 = vsel %vm820, %v756, 0
      %v825 = vsel %vm820, %v757, 0
      %v828 = vsel %vm820, %v758, 0
      %v831 = vsel %vm820, %v759, 0
      %833 = vmatpush.bf16.msra.mxu0 0
      %834 = vmatpush.bf16.msra.mxu0 0
      %835 = vmatpush.bf16.msra.mxu0 0
      %836 = vmatpush.bf16.msra.mxu0 0
      %837 = vmatpush.bf16.msra.mxu0 0
      %838 = vmatpush.bf16.msra.mxu0 %v804
      %839 = vmatpush.bf16.msra.mxu0 %v800
      %840 = vmatpush.bf16.msra.mxu0 %v796
      %841 = vmatmul.bf16.gmra.mxu0 %v822
      %v842 = vpop.f32.mrf.mxu0
      %v843 = vadd.f32 %v703, %v842
      %v844 = vpop.f32.mrf.mxu0
      %v845 = vadd.f32 %v708, %v844
      %846 = vmatmul.bf16.gmra.mxu0 %v825
      %v847 = vpop.f32.mrf.mxu0
      %v848 = vadd.f32 %v713, %v847
      %v849 = vpop.f32.mrf.mxu0
      %v850 = vadd.f32 %v718, %v849
      %851 = vmatmul.bf16.gmra.mxu0 %v828
      %v852 = vpop.f32.mrf.mxu0
      %v853 = vadd.f32 %v723, %v852
      %v854 = vpop.f32.mrf.mxu0
      %v855 = vadd.f32 %v728, %v854
      %856 = vmatmul.bf16.gmra.mxu0 %v831
      %v857 = vpop.f32.mrf.mxu0
      %v858 = vadd.f32 %v733, %v857
      %v859 = vpop.f32.mrf.mxu0
      %v860 = vadd.f32 %v738, %v859
      %861 = vdwg.mxu0
      %862 = vmatpush.bf16.msra.mxu0 0
      %863 = vmatpush.bf16.msra.mxu0 0
      %864 = vmatpush.bf16.msra.mxu0 0
      %865 = vmatpush.bf16.msra.mxu0 0
      %866 = vmatpush.bf16.msra.mxu0 0
      %867 = vmatpush.bf16.msra.mxu0 %v805
      %868 = vmatpush.bf16.msra.mxu0 %v801
      %869 = vmatpush.bf16.msra.mxu0 %v797
      %870 = vmatmul.bf16.gmra.mxu0 %v822
      %v871 = vpop.f32.mrf.mxu0
      %v872 = vadd.f32 %v703, %v871
      %v873 = vpop.f32.mrf.mxu0
      %v874 = vadd.f32 %v708, %v873
      %875 = vmatmul.bf16.gmra.mxu0 %v825
      %v876 = vpop.f32.mrf.mxu0
      %v877 = vadd.f32 %v713, %v876
      %v878 = vpop.f32.mrf.mxu0
      %v879 = vadd.f32 %v718, %v878
      %880 = vmatmul.bf16.gmra.mxu0 %v828
      %v881 = vpop.f32.mrf.mxu0
      %v882 = vadd.f32 %v723, %v881
      %v883 = vpop.f32.mrf.mxu0
      %v884 = vadd.f32 %v728, %v883
      %885 = vmatmul.bf16.gmra.mxu0 %v831
      %v886 = vpop.f32.mrf.mxu0
      %v887 = vadd.f32 %v733, %v886
      %v888 = vpop.f32.mrf.mxu0
      %v889 = vadd.f32 %v738, %v888
      %890 = vdwg.mxu0
      %891 = vmatpush.bf16.msra.mxu0 0
      %892 = vmatpush.bf16.msra.mxu0 0
      %893 = vmatpush.bf16.msra.mxu0 0
      %894 = vmatpush.bf16.msra.mxu0 0
      %895 = vmatpush.bf16.msra.mxu0 0
      %896 = vmatpush.bf16.msra.mxu0 %v806
      %897 = vmatpush.bf16.msra.mxu0 %v802
      %898 = vmatpush.bf16.msra.mxu0 %v798
      %899 = vmatmul.bf16.gmra.mxu0 %v822
      %v900 = vpop.f32.mrf.mxu0
      %v901 = vadd.f32 %v703, %v900
      %v902 = vpop.f32.mrf.mxu0
      %v903 = vadd.f32 %v708, %v902
      %904 = vmatmul.bf16.gmra.mxu0 %v825
      %v905 = vpop.f32.mrf.mxu0
      %v906 = vadd.f32 %v713, %v905
      %v907 = vpop.f32.mrf.mxu0
      %v908 = vadd.f32 %v718, %v907
      %909 = vmatmul.bf16.gmra.mxu0 %v828
      %v910 = vpop.f32.mrf.mxu0
      %v911 = vadd.f32 %v723, %v910
      %v912 = vpop.f32.mrf.mxu0
      %v913 = vadd.f32 %v728, %v912
      %914 = vmatmul.bf16.gmra.mxu0 %v831
      %v915 = vpop.f32.mrf.mxu0
      %v916 = vadd.f32 %v733, %v915
      %v917 = vpop.f32.mrf.mxu0
      %v918 = vadd.f32 %v738, %v917
      %919 = vdwg.mxu0
      %920 = vmatpush.bf16.msra.mxu0 0
      %921 = vmatpush.bf16.msra.mxu0 0
      %922 = vmatpush.bf16.msra.mxu0 0
      %923 = vmatpush.bf16.msra.mxu0 0
      %924 = vmatpush.bf16.msra.mxu0 0
      %925 = vmatpush.bf16.msra.mxu0 %v807
      %926 = vmatpush.bf16.msra.mxu0 %v803
      %927 = vmatpush.bf16.msra.mxu0 %v799
      %928 = vmatmul.bf16.gmra.mxu0 %v822
      %v929 = vpop.f32.mrf.mxu0
      %v930 = vadd.f32 %v703, %v929
      %v931 = vpop.f32.mrf.mxu0
      %v932 = vadd.f32 %v708, %v931
      %933 = vmatmul.bf16.gmra.mxu0 %v825
      %v934 = vpop.f32.mrf.mxu0
      %v935 = vadd.f32 %v713, %v934
      %v936 = vpop.f32.mrf.mxu0
      %v937 = vadd.f32 %v718, %v936
      %938 = vmatmul.bf16.gmra.mxu0 %v828
      %v939 = vpop.f32.mrf.mxu0
      %v940 = vadd.f32 %v723, %v939
      %v941 = vpop.f32.mrf.mxu0
      %v942 = vadd.f32 %v728, %v941
      %943 = vmatmul.bf16.gmra.mxu0 %v831
      %v944 = vpop.f32.mrf.mxu0
      %v945 = vadd.f32 %v733, %v944
      %v946 = vpop.f32.mrf.mxu0
      %v947 = vadd.f32 %v738, %v946
      %948 = vdwg.mxu0
      %v949 = vmax.f32 %v843, 0.0
      %v950 = vmax.f32 %v872, 0.0
      %v951 = vmax.f32 %v901, 0.0
      %v952 = vmax.f32 %v930, 0.0
      %v953 = vmax.f32 %v845, 0.0
      %v954 = vmax.f32 %v874, 0.0
      %v955 = vmax.f32 %v903, 0.0
      %v956 = vmax.f32 %v932, 0.0
      %v957 = vmax.f32 %v848, 0.0
      %v958 = vmax.f32 %v877, 0.0
      %v959 = vmax.f32 %v906, 0.0
      %v960 = vmax.f32 %v935, 0.0
      %v961 = vmax.f32 %v850, 0.0
      %v962 = vmax.f32 %v879, 0.0
      %v963 = vmax.f32 %v908, 0.0
      %v964 = vmax.f32 %v937, 0.0
      %v965 = vmax.f32 %v853, 0.0
      %v966 = vmax.f32 %v882, 0.0
      %v967 = vmax.f32 %v911, 0.0
      %v968 = vmax.f32 %v940, 0.0
      %v969 = vmax.f32 %v855, 0.0
      %v970 = vmax.f32 %v884, 0.0
      %v971 = vmax.f32 %v913, 0.0
      %v972 = vmax.f32 %v942, 0.0
      %v973 = vmax.f32 %v858, 0.0
      %v974 = vmax.f32 %v887, 0.0
      %v975 = vmax.f32 %v916, 0.0
      %v976 = vmax.f32 %v945, 0.0
      %v977 = vmax.f32 %v860, 0.0
      %v978 = vmax.f32 %v889, 0.0
      %v979 = vmax.f32 %v918, 0.0
      %v980 = vmax.f32 %v947, 0.0
      %v981 = vld [vmem:[%s4] sm:$0xf]
      %v982 = vld [vmem:[%s4 + $0x4] sm:$0xf]
      %v983 = vld [vmem:[%s4 + $0x8] sm:$0xf]
      %v984 = vld [vmem:[%s4 + $0xc] sm:$0xf]
      %v985 = vld [vmem:[%s4 + $0x10] sm:$0xf]
      %v986 = vld [vmem:[%s4 + $0x14] sm:$0xf]
      %v987 = vld [vmem:[%s4 + $0x18] sm:$0xf]
      %v988 = vld [vmem:[%s4 + $0x1c] sm:$0xf]
      %v989 = vpack.c.bf16 %v953, %v949
      %v990 = vpack.c.bf16 %v954, %v950
      %v991 = vpack.c.bf16 %v955, %v951
      %v992 = vpack.c.bf16 %v956, %v952
      %v993 = vpack.c.bf16 %v961, %v957
      %v994 = vpack.c.bf16 %v962, %v958
      %v995 = vpack.c.bf16 %v963, %v959
      %v996 = vpack.c.bf16 %v964, %v960
      %v997 = vpack.c.bf16 %v969, %v965
      %v998 = vpack.c.bf16 %v970, %v966
      %v999 = vpack.c.bf16 %v971, %v967
      %v1000 = vpack.c.bf16 %v972, %v968
      %v1001 = vpack.c.bf16 %v977, %v973
      %v1002 = vpack.c.bf16 %v978, %v974
      %v1003 = vpack.c.bf16 %v979, %v975
      %v1004 = vpack.c.bf16 %v980, %v976
      %v1005 = vld [vmem:[%s5] sm:$0xff]
      %v1006 = vld [vmem:[%s5 + $0x8] sm:$0xff]
      %v1007 = vld [vmem:[%s5 + $0x10] sm:$0xff]
      %v1008 = vld [vmem:[%s5 + $0x18] sm:$0xff]
      %v1009 = vld [vmem:[%s5 + $0x20] sm:$0xff]
      %v1010 = vld [vmem:[%s5 + $0x28] sm:$0xff]
      %v1011 = vld [vmem:[%s5 + $0x30] sm:$0xff]
      %v1012 = vld [vmem:[%s5 + $0x38] sm:$0xff]
      %1014 = vset.pattern.permute.xlu0 0
      %1015 = vperm.xlu0 %1014, %v1005
      %v1016 = vpop.permute.xlu0 %1015
      %1019 = vset.pattern.permute.xlu0 0
      %1020 = vperm.xlu0 %1019, %v1006
      %v1021 = vpop.permute.xlu0 %1020
      %1024 = vset.pattern.permute.xlu0 0
      %1025 = vperm.xlu0 %1024, %v1007
      %v1026 = vpop.permute.xlu0 %1025
      %1029 = vset.pattern.permute.xlu0 0
      %1030 = vperm.xlu0 %1029, %v1008
      %v1031 = vpop.permute.xlu0 %1030
      %1034 = vset.pattern.permute.xlu0 0
      %1035 = vperm.xlu0 %1034, %v1009
      %v1036 = vpop.permute.xlu0 %1035
      %1039 = vset.pattern.permute.xlu0 0
      %1040 = vperm.xlu0 %1039, %v1010
      %v1041 = vpop.permute.xlu0 %1040
      %1044 = vset.pattern.permute.xlu0 0
      %1045 = vperm.xlu0 %1044, %v1011
      %v1046 = vpop.permute.xlu0 %1045
      %1049 = vset.pattern.permute.xlu0 0
      %1050 = vperm.xlu0 %1049, %v1012
      %v1051 = vpop.permute.xlu0 %1050
      %v1061 = vunpack.c.l.b16 %v981
      %v1062 = vunpack.c.l.b16 %v982
      %v1063 = vunpack.c.l.b16 %v983
      %v1064 = vunpack.c.l.b16 %v984
      %v1065 = vunpack.c.l.b16 %v985
      %v1066 = vunpack.c.l.b16 %v986
      %v1067 = vunpack.c.l.b16 %v987
      %v1068 = vunpack.c.l.b16 %v988
      %v1069 = vpack.c.b16 %v1062, %v1061
      %v1070 = vpack.c.b16 %v1064, %v1063
      %v1071 = vpack.c.b16 %v1066, %v1065
      %v1072 = vpack.c.b16 %v1068, %v1067
      %vm1073 = vcmask 523264
      %v1075 = vsel %vm1073, %v1069, 0
      %v1078 = vsel %vm1073, %v1070, 0
      %v1081 = vsel %vm1073, %v1071, 0
      %v1084 = vsel %vm1073, %v1072, 0
      %1086 = vmatpush.bf16.msra.mxu0 0
      %1087 = vmatpush.bf16.msra.mxu0 0
      %1088 = vmatpush.bf16.msra.mxu0 0
      %1089 = vmatpush.bf16.msra.mxu0 0
      %1090 = vmatpush.bf16.msra.mxu0 %v1001
      %1091 = vmatpush.bf16.msra.mxu0 %v997
      %1092 = vmatpush.bf16.msra.mxu0 %v993
      %1093 = vmatpush.bf16.msra.mxu0 %v989
      %1094 = vmatmul.bf16.gmra.mxu0 %v1075
      %v1095 = vpop.f32.mrf.mxu0
      %v1096 = vadd.f32 %v1016, %v1095
      %v1097 = vpop.f32.mrf.mxu0
      %v1098 = vadd.f32 %v1021, %v1097
      %1099 = vmatmul.bf16.gmra.mxu0 %v1078
      %v1100 = vpop.f32.mrf.mxu0
      %v1101 = vadd.f32 %v1026, %v1100
      %v1102 = vpop.f32.mrf.mxu0
      %v1103 = vadd.f32 %v1031, %v1102
      %1104 = vmatmul.bf16.gmra.mxu0 %v1081
      %v1105 = vpop.f32.mrf.mxu0
      %v1106 = vadd.f32 %v1036, %v1105
      %v1107 = vpop.f32.mrf.mxu0
      %v1108 = vadd.f32 %v1041, %v1107
      %1109 = vmatmul.bf16.gmra.mxu0 %v1084
      %v1110 = vpop.f32.mrf.mxu0
      %v1111 = vadd.f32 %v1046, %v1110
      %v1112 = vpop.f32.mrf.mxu0
      %v1113 = vadd.f32 %v1051, %v1112
      %1114 = vdwg.mxu0
      %1115 = vmatpush.bf16.msra.mxu0 0
      %1116 = vmatpush.bf16.msra.mxu0 0
      %1117 = vmatpush.bf16.msra.mxu0 0
      %1118 = vmatpush.bf16.msra.mxu0 0
      %1119 = vmatpush.bf16.msra.mxu0 %v1002
      %1120 = vmatpush.bf16.msra.mxu0 %v998
      %1121 = vmatpush.bf16.msra.mxu0 %v994
      %1122 = vmatpush.bf16.msra.mxu0 %v990
      %1123 = vmatmul.bf16.gmra.mxu0 %v1075
      %v1124 = vpop.f32.mrf.mxu0
      %v1125 = vadd.f32 %v1016, %v1124
      %v1126 = vpop.f32.mrf.mxu0
      %v1127 = vadd.f32 %v1021, %v1126
      %1128 = vmatmul.bf16.gmra.mxu0 %v1078
      %v1129 = vpop.f32.mrf.mxu0
      %v1130 = vadd.f32 %v1026, %v1129
      %v1131 = vpop.f32.mrf.mxu0
      %v1132 = vadd.f32 %v1031, %v1131
      %1133 = vmatmul.bf16.gmra.mxu0 %v1081
      %v1134 = vpop.f32.mrf.mxu0
      %v1135 = vadd.f32 %v1036, %v1134
      %v1136 = vpop.f32.mrf.mxu0
      %v1137 = vadd.f32 %v1041, %v1136
      %1138 = vmatmul.bf16.gmra.mxu0 %v1084
      %v1139 = vpop.f32.mrf.mxu0
      %v1140 = vadd.f32 %v1046, %v1139
      %v1141 = vpop.f32.mrf.mxu0
      %v1142 = vadd.f32 %v1051, %v1141
      %1143 = vdwg.mxu0
      %1144 = vmatpush.bf16.msra.mxu0 0
      %1145 = vmatpush.bf16.msra.mxu0 0
      %1146 = vmatpush.bf16.msra.mxu0 0
      %1147 = vmatpush.bf16.msra.mxu0 0
      %1148 = vmatpush.bf16.msra.mxu0 %v1003
      %1149 = vmatpush.bf16.msra.mxu0 %v999
      %1150 = vmatpush.bf16.msra.mxu0 %v995
      %1151 = vmatpush.bf16.msra.mxu0 %v991
      %1152 = vmatmul.bf16.gmra.mxu0 %v1075
      %v1153 = vpop.f32.mrf.mxu0
      %v1154 = vadd.f32 %v1016, %v1153
      %v1155 = vpop.f32.mrf.mxu0
      %v1156 = vadd.f32 %v1021, %v1155
      %1157 = vmatmul.bf16.gmra.mxu0 %v1078
      %v1158 = vpop.f32.mrf.mxu0
      %v1159 = vadd.f32 %v1026, %v1158
      %v1160 = vpop.f32.mrf.mxu0
      %v1161 = vadd.f32 %v1031, %v1160
      %1162 = vmatmul.bf16.gmra.mxu0 %v1081
      %v1163 = vpop.f32.mrf.mxu0
      %v1164 = vadd.f32 %v1036, %v1163
      %v1165 = vpop.f32.mrf.mxu0
      %v1166 = vadd.f32 %v1041, %v1165
      %1167 = vmatmul.bf16.gmra.mxu0 %v1084
      %v1168 = vpop.f32.mrf.mxu0
      %v1169 = vadd.f32 %v1046, %v1168
      %v1170 = vpop.f32.mrf.mxu0
      %v1171 = vadd.f32 %v1051, %v1170
      %1172 = vdwg.mxu0
      %1173 = vmatpush.bf16.msra.mxu0 0
      %1174 = vmatpush.bf16.msra.mxu0 0
      %1175 = vmatpush.bf16.msra.mxu0 0
      %1176 = vmatpush.bf16.msra.mxu0 0
      %1177 = vmatpush.bf16.msra.mxu0 %v1004
      %1178 = vmatpush.bf16.msra.mxu0 %v1000
      %1179 = vmatpush.bf16.msra.mxu0 %v996
      %1180 = vmatpush.bf16.msra.mxu0 %v992
      %1181 = vmatmul.bf16.gmra.mxu0 %v1075
      %v1182 = vpop.f32.mrf.mxu0
      %v1183 = vadd.f32 %v1016, %v1182
      %v1184 = vpop.f32.mrf.mxu0
      %v1185 = vadd.f32 %v1021, %v1184
      %1186 = vmatmul.bf16.gmra.mxu0 %v1078
      %v1187 = vpop.f32.mrf.mxu0
      %v1188 = vadd.f32 %v1026, %v1187
      %v1189 = vpop.f32.mrf.mxu0
      %v1190 = vadd.f32 %v1031, %v1189
      %1191 = vmatmul.bf16.gmra.mxu0 %v1081
      %v1192 = vpop.f32.mrf.mxu0
      %v1193 = vadd.f32 %v1036, %v1192
      %v1194 = vpop.f32.mrf.mxu0
      %v1195 = vadd.f32 %v1041, %v1194
      %1196 = vmatmul.bf16.gmra.mxu0 %v1084
      %v1197 = vpop.f32.mrf.mxu0
      %v1198 = vadd.f32 %v1046, %v1197
      %v1199 = vpop.f32.mrf.mxu0
      %v1200 = vadd.f32 %v1051, %v1199
      %1201 = vdwg.mxu0
      %v1202 = vmax.f32 %v1096, 0.0
      %v1203 = vmax.f32 %v1125, 0.0
      %v1204 = vmax.f32 %v1154, 0.0
      %v1205 = vmax.f32 %v1183, 0.0
      %v1206 = vmax.f32 %v1098, 0.0
      %v1207 = vmax.f32 %v1127, 0.0
      %v1208 = vmax.f32 %v1156, 0.0
      %v1209 = vmax.f32 %v1185, 0.0
      %v1210 = vmax.f32 %v1101, 0.0
      %v1211 = vmax.f32 %v1130, 0.0
      %v1212 = vmax.f32 %v1159, 0.0
      %v1213 = vmax.f32 %v1188, 0.0
      %v1214 = vmax.f32 %v1103, 0.0
      %v1215 = vmax.f32 %v1132, 0.0
      %v1216 = vmax.f32 %v1161, 0.0
      %v1217 = vmax.f32 %v1190, 0.0
      %v1218 = vmax.f32 %v1106, 0.0
      %v1219 = vmax.f32 %v1135, 0.0
      %v1220 = vmax.f32 %v1164, 0.0
      %v1221 = vmax.f32 %v1193, 0.0
      %v1222 = vmax.f32 %v1108, 0.0
      %v1223 = vmax.f32 %v1137, 0.0
      %v1224 = vmax.f32 %v1166, 0.0
      %v1225 = vmax.f32 %v1195, 0.0
      %v1226 = vmax.f32 %v1111, 0.0
      %v1227 = vmax.f32 %v1140, 0.0
      %v1228 = vmax.f32 %v1169, 0.0
      %v1229 = vmax.f32 %v1198, 0.0
      %v1230 = vmax.f32 %v1113, 0.0
      %v1231 = vmax.f32 %v1142, 0.0
      %v1232 = vmax.f32 %v1171, 0.0
      %v1233 = vmax.f32 %v1200, 0.0
      %v1234 = vld [vmem:[%s6] sm:$0x3]
      %v1235 = vpack.c.bf16 %v1206, %v1202
      %v1236 = vpack.c.bf16 %v1207, %v1203
      %v1237 = vpack.c.bf16 %v1208, %v1204
      %v1238 = vpack.c.bf16 %v1209, %v1205
      %v1239 = vpack.c.bf16 %v1214, %v1210
      %v1240 = vpack.c.bf16 %v1215, %v1211
      %v1241 = vpack.c.bf16 %v1216, %v1212
      %v1242 = vpack.c.bf16 %v1217, %v1213
      %v1243 = vpack.c.bf16 %v1222, %v1218
      %v1244 = vpack.c.bf16 %v1223, %v1219
      %v1245 = vpack.c.bf16 %v1224, %v1220
      %v1246 = vpack.c.bf16 %v1225, %v1221
      %v1247 = vpack.c.bf16 %v1230, %v1226
      %v1248 = vpack.c.bf16 %v1231, %v1227
      %v1249 = vpack.c.bf16 %v1232, %v1228
      %v1250 = vpack.c.bf16 %v1233, %v1229
      %v1251 = vld [vmem:[%s7] sm:$0x7]
      %1253 = vset.pattern.permute.xlu0 0
      %1254 = vperm.xlu0 %1253, %v1251
      %v1255 = vpop.permute.xlu0 %1254
      %v1258 = vsel %vm1073, %v1234, 0
      %1260 = vmatpush.bf16.msra.mxu0 0
      %1261 = vmatpush.bf16.msra.mxu0 0
      %1262 = vmatpush.bf16.msra.mxu0 0
      %1263 = vmatpush.bf16.msra.mxu0 0
      %1264 = vmatpush.bf16.msra.mxu0 %v1247
      %1265 = vmatpush.bf16.msra.mxu0 %v1243
      %1266 = vmatpush.bf16.msra.mxu0 %v1239
      %1267 = vmatpush.bf16.msra.mxu0 %v1235
      %1268 = vmatmul.bf16.gmra.mxu0 %v1258
      %v1269 = vpop.f32.mrf.mxu0
      %v1270 = vadd.f32 %v1255, %v1269
      %v1271 = vpop.f32.mrf.mxu0
      %1272 = vdwg.mxu0
      %1273 = vmatpush.bf16.msra.mxu0 0
      %1274 = vmatpush.bf16.msra.mxu0 0
      %1275 = vmatpush.bf16.msra.mxu0 0
      %1276 = vmatpush.bf16.msra.mxu0 0
      %1277 = vmatpush.bf16.msra.mxu0 %v1248
      %1278 = vmatpush.bf16.msra.mxu0 %v1244
      %1279 = vmatpush.bf16.msra.mxu0 %v1240
      %1280 = vmatpush.bf16.msra.mxu0 %v1236
      %1281 = vmatmul.bf16.gmra.mxu0 %v1258
      %v1282 = vpop.f32.mrf.mxu0
      %v1283 = vadd.f32 %v1255, %v1282
      %v1284 = vpop.f32.mrf.mxu0
      %1285 = vdwg.mxu0
      %1286 = vmatpush.bf16.msra.mxu0 0
      %1287 = vmatpush.bf16.msra.mxu0 0
      %1288 = vmatpush.bf16.msra.mxu0 0
      %1289 = vmatpush.bf16.msra.mxu0 0
      %1290 = vmatpush.bf16.msra.mxu0 %v1249
      %1291 = vmatpush.bf16.msra.mxu0 %v1245
      %1292 = vmatpush.bf16.msra.mxu0 %v1241
      %1293 = vmatpush.bf16.msra.mxu0 %v1237
      %1294 = vmatmul.bf16.gmra.mxu0 %v1258
      %v1295 = vpop.f32.mrf.mxu0
      %v1296 = vadd.f32 %v1255, %v1295
      %v1297 = vpop.f32.mrf.mxu0
      %1298 = vdwg.mxu0
      %1299 = vmatpush.bf16.msra.mxu0 0
      %1300 = vmatpush.bf16.msra.mxu0 0
      %1301 = vmatpush.bf16.msra.mxu0 0
      %1302 = vmatpush.bf16.msra.mxu0 0
      %1303 = vmatpush.bf16.msra.mxu0 %v1250
      %1304 = vmatpush.bf16.msra.mxu0 %v1246
      %1305 = vmatpush.bf16.msra.mxu0 %v1242
      %1306 = vmatpush.bf16.msra.mxu0 %v1238
      %1307 = vmatmul.bf16.gmra.mxu0 %v1258
      %v1308 = vpop.f32.mrf.mxu0
      %v1309 = vadd.f32 %v1255, %v1308
      %v1310 = vpop.f32.mrf.mxu0
      %1311 = vdwg.mxu0
      %v1316 = vrot.slane %v1283, 4
      %v1317 = vrot.slane %v1309, 4
      %v1318 = vsel %vm616, %v1270, %v1316
      %v1319 = vsel %vm616, %v1296, %v1317
      %1322 = vst [vmem:[%s385] sm:$0x77] %v1318
      %1323 = vst [vmem:[%s385 + $0x8] sm:$0x77] %v1319
      %s1324 = smul.u32 4, %s23
      %p1325 = scmp.lt.s32.totalorder %s24, 1
      %s1326 = scalar_select %p1325, %s24, 1
      %p1327 = scmp.lt.s32.totalorder %s1324, 3
      %s1328 = scalar_select %p1327, %s1324, 3
      %s1329 = smul.addr %s1326, 4
      %s1330 = sadd.s32 %s1328, %s1329
      %s1331 = smul.addr %s1330, 4
      %s1332 = scalar_lea.vmem %s8, %s1331
      // Predicated region
      $region57: #{_forward_impl.1} parent=51 // pred_check
        %p1333 = pneg %p236
      $region58: #{_forward_impl.1} parent=51 // pred_check_branch
        %1335 = sbr.rel (%p1333) target = $region60
      $region59: #{_forward_impl.1} parent=51 // pred_region
        %s1336 = smul.u32 4, %s23
      $region60: #{_forward_impl.1} parent=51 // pred_fallthru
        _
    $region52: #{_forward_impl.1} parent=5 // pred_fallthru
      _
    %p1337 = scmp.le.s32.totalorder 2, %s14
    // Predicated region
    $region61: #{_forward_impl.1} parent=5 // pred_check
      %p1338 = pneg %p1337
    $region62: #{_forward_impl.1} parent=5 // pred_check_branch
      %1340 = sbr.rel (%p1338) target = $region64
    $region63: #{_forward_impl.1} parent=5 // pred_region
      %s1341 = ssub.s32 %s14, 2
      // Predicated region
      $region65: #{_forward_impl.1} parent=63 // pred_check
        %p1342 = pneg %p242
      $region66: #{_forward_impl.1} parent=63 // pred_check_branch
        %1344 = sbr.rel (%p1342) target = $region68
      $region67: #{_forward_impl.1} parent=63 // pred_region
        %s1345 = smul.u32 4, %s25
        %p1346 = scmp.lt.s32.totalorder %s26, 1
        %s1347 = scalar_select %p1346, %s26, 1
        %p1348 = scmp.lt.s32.totalorder %s1345, 3
        %s1349 = scalar_select %p1348, %s1345, 3
        %s1350 = smul.addr %s1347, 4
        %s1351 = sadd.s32 %s1349, %s1350
        %s1352 = smul.addr %s1351, 4
        %s1353 = scalar_lea.vmem %s8, %s1352
      $region68: #{_forward_impl.1} parent=63 // pred_fallthru
        _
    $region64: #{_forward_impl.1} parent=5 // pred_fallthru
      _
  $region6: #{_forward_impl.1} parent=0 // loop_footer
    %s18 = sadd.s32 1, %s14
  $region7: #{_forward_impl.1} parent=0 // loop_footer_branch
    %13 = sbr.rel target = $region3
  $region8: #{_forward_impl.1} parent=0 // loop_exit
    _

</llo_original>
